<compile_context>
chip_gen: v7x
topology: tpu7x:2x2x1
jax: 0.10.0
libtpu: 0.0.40
codegen_flags: <defaults>
</compile_context>

<pallas_src>
import functools

import jax
import jax.numpy as jnp
from jax.experimental import pallas as pl
from jax.experimental.pallas import tpu as pltpu

LANE = 128          # vreg lane width: hidden / class dims padded to this
BF16_SUBLANE = 16   # bf16 sublane pack: only the input-feature dim needs this


def _pad_to(n, m):
    return ((n + m - 1) // m) * m


# ---------------------------------------------------------------------------
# Fused kernel: (Linear+foldedBN+ReLU) x (L-1)  ->  Linear -> log_softmax
# ---------------------------------------------------------------------------
def make_fused_mlp_kernel(num_layers):
    """Kernel over refs: (x, w0,b0, w1,b1, ..., wL,bL, out)."""

    def kernel(x_ref, *refs):
        o_ref = refs[-1]
        wb = refs[:-1]

        h = x_ref[...]                       # bf16 (TM, IN_p) straight off DMA
        for li in range(num_layers - 1):
            w = wb[2 * li][...]              # bf16 (F_in_p, H_p), BN scale folded
            b = wb[2 * li + 1][...]          # f32  (1, H_p),     BN shift folded
            if h.dtype != jnp.bfloat16:
                h = h.astype(jnp.bfloat16)
            y = jnp.dot(h, w, preferred_element_type=jnp.float32)
            h = jnp.maximum(y + b, 0.0)      # f32 bias+ReLU (dropout = identity)

        # final linear; padded class columns carry a -1e30 folded bias so they
        # drop out of the softmax with zero in-kernel masking (no iota/where).
        w = wb[-2][...]
        b = wb[-1][...]
        if h.dtype != jnp.bfloat16:
            h = h.astype(jnp.bfloat16)
        y = jnp.dot(h, w, preferred_element_type=jnp.float32) + b
        m = jnp.max(y, axis=-1, keepdims=True)
        z = y - m
        lse = jnp.log(jnp.sum(jnp.exp(z), axis=-1, keepdims=True))
        o_ref[...] = z - lse                 # f32, lane-dense (TM, C_p) store

    return kernel


# ---------------------------------------------------------------------------
# Host-side wrapper: batch-tiled parallel grid, resident weights
# ---------------------------------------------------------------------------
def _choose_tm(n, tm_max):
    """Largest tile up to tm_max that still leaves >=2 grid tiles (one per v7x
    TensorCore) when the batch allows; multiple of 16 for bf16 sublane pack."""
    half = _pad_to(max((n + 1) // 2, 1), BF16_SUBLANE)
    return max(min(tm_max, half), BF16_SUBLANE)


@functools.partial(
    jax.jit, static_argnames=("out_channels", "tm_max", "single_buffer_weights"))
def mlp_forward(weights, x, *, out_channels, tm_max=512, single_buffer_weights=True):
    """weights: tuple of (W_bf16 padded, b_f32 padded) per layer (BN folded)."""
    num_layers = len(weights)
    in_p = weights[0][0].shape[0]        # input-feature dim expected by layer 0
    c_p = weights[-1][0].shape[1]        # padded class dim

    n, f_in = x.shape
    tm = _choose_tm(n, tm_max)
    n_p = _pad_to(n, tm)

    x_bf16 = x.astype(jnp.bfloat16)      # bf16 input: half the DMA, same numerics
    if n_p == n and f_in == in_p:
        x_p = x_bf16                     # no host-side pad copy at all
    else:
        x_p = jnp.zeros((n_p, in_p), jnp.bfloat16).at[:n, :f_in].set(x_bf16)

    kernel = make_fused_mlp_kernel(num_layers)

    # Constant index_map -> weights/biases resident in VMEM across batch tiles.
    # Buffered(1): no point double-buffering something that is never re-fetched
    # (halves the resident-weight VMEM footprint; matters on v7x's 64 MiB).
    resident_kw = {"pipeline_mode": pl.Buffered(1)} if single_buffer_weights else {}

    in_specs = [pl.BlockSpec((tm, in_p), lambda i: (i, 0))]
    flat_args = [x_p]
    for w, b in weights:
        in_specs.append(pl.BlockSpec(w.shape, lambda i: (0, 0), **resident_kw))
        in_specs.append(pl.BlockSpec(b.shape, lambda i: (0, 0), **resident_kw))
        flat_args.extend([w, b])

    out = pl.pallas_call(
        kernel,
        out_shape=jax.ShapeDtypeStruct((n_p, c_p), jnp.float32),
        grid=(n_p // tm,),
        in_specs=in_specs,
        out_specs=pl.BlockSpec((tm, c_p), lambda i: (i, 0)),
        compiler_params=pltpu.CompilerParams(
            dimension_semantics=("parallel",),      # shard batch tiles across TCs
            vmem_limit_bytes=32 * 1024 * 1024,
        ),
    )(*flat_args)

    return out[:n, :out_channels]


# ---------------------------------------------------------------------------
# Parameters: torch-like init, then fold BN + pad + cast for the kernel
# ---------------------------------------------------------------------------
def init_mlp_params(key, in_channels, hidden_channels, out_channels, num_layers):
    """Synthetic parameters matching torch.nn shapes (Linear weight stored as
    (fan_in, fan_out), i.e. transposed; BatchNorm1d running stats)."""
    dims = [in_channels] + [hidden_channels] * (num_layers - 1) + [out_channels]
    lins, bns = [], []
    for i in range(num_layers):
        key, kw, kb = jax.random.split(key, 3)
        fan_in, fan_out = dims[i], dims[i + 1]
        bound = 1.0 / jnp.sqrt(fan_in)
        w = jax.random.uniform(kw, (fan_in, fan_out), jnp.float32, -bound, bound)
        b = jax.random.uniform(kb, (fan_out,), jnp.float32, -bound, bound)
        lins.append((w, b))
    eps = 1e-5
    for _ in range(num_layers - 1):
        key, kg, kbt, km, kv = jax.random.split(key, 5)
        gamma = jax.random.uniform(kg, (hidden_channels,), jnp.float32, 0.5, 1.5)
        beta = jax.random.uniform(kbt, (hidden_channels,), jnp.float32, -0.5, 0.5)
        r_mean = jax.random.uniform(km, (hidden_channels,), jnp.float32, -0.5, 0.5)
        r_var = jax.random.uniform(kv, (hidden_channels,), jnp.float32, 0.5, 1.5)
        bns.append((gamma, beta, r_mean, r_var, eps))
    return {"lins": lins, "bns": bns}


def prepare_kernel_params(params):
    """Fold eval-mode BN into (W, b); pad hidden/class dims to 128 (input-feature
    dim only to the bf16 sublane); fold the class-padding mask into the final
    bias; cast W -> bf16."""
    lins, bns = params["lins"], params["bns"]
    num_layers = len(lins)
    out = []
    for i in range(num_layers):
        w, b = lins[i]
        if i < num_layers - 1:
            gamma, beta, r_mean, r_var, eps = bns[i]
            scale = gamma / jnp.sqrt(r_var + eps)
            shift = beta - r_mean * scale
            w = w * scale[None, :]          # fold BN scale into weight columns
            b = b * scale + shift           # fold bias + BN shift
        fi, fo = w.shape
        fi_p = _pad_to(fi, BF16_SUBLANE) if i == 0 else _pad_to(fi, LANE)
        fo_p = _pad_to(fo, LANE)
        w_p = jnp.zeros((fi_p, fo_p), jnp.float32).at[:fi, :fo].set(w)
        b_p = jnp.zeros((1, fo_p), jnp.float32).at[:, :fo].set(b)
        if i == num_layers - 1 and fo_p > fo:
            # padded classes: 0 matmul contribution + (-1e30) bias -> masked out
            b_p = b_p.at[:, fo:].set(-1e30)
        out.append((w_p.astype(jnp.bfloat16), b_p))
    return tuple(out)


def mlp_forward_ref(params, x):
    """Pure-JAX f32 reference with the *unfolded* original parameters."""
    lins, bns = params["lins"], params["bns"]
    h = x
    for i in range(len(lins) - 1):
        w, b = lins[i]
        gamma, beta, r_mean, r_var, eps = bns[i]
        y = h @ w + b
        y = (y - r_mean) / jnp.sqrt(r_var + eps) * gamma + beta
        h = jnp.maximum(y, 0.0)
        # dropout: identity in eval mode
    w, b = lins[-1]
    return jax.nn.log_softmax(h @ w + b, axis=-1)


# ---------------------------------------------------------------------------
if __name__ == "__main__":
    # shapes consistent with the module; batch big enough to exercise the grid
    batch, in_channels, hidden_channels, out_channels = 256, 16, 32, 8
    num_layers = 3
    dropout = 0.5  # identity at inference time
    # TODO(synk): training-mode BatchNorm (batch stats) and dropout masking are
    # not implemented; this kernel covers the eval-mode forward pass.

    key = jax.random.PRNGKey(0)
    key, kx, kp = jax.random.split(key, 3)
    x = jax.random.normal(kx, (batch, in_channels), jnp.float32)
    params = init_mlp_params(kp, in_channels, hidden_channels, out_channels, num_layers)
    kernel_weights = prepare_kernel_params(params)

    try:
        out = jax.block_until_ready(
            mlp_forward(kernel_weights, x, out_channels=out_channels))
    except Exception:
        # older JAX without pipeline_mode/Buffered support on TPU pallas_call:
        # fall back to default double-buffered resident weights.
        out = jax.block_until_ready(
            mlp_forward(kernel_weights, x, out_channels=out_channels,
                        single_buffer_weights=False))

    ref = mlp_forward_ref(params, x)
    assert out.shape == (batch, out_channels)
    # bf16 MXU operands (f32 accumulation) -> looser tolerance vs f32 reference
    assert jnp.allclose(out, ref, atol=5e-2, rtol=5e-2), "mismatch vs reference"
    # rows of log_softmax must exponentiate-sum to 1
    assert jnp.allclose(jnp.exp(out).sum(-1), 1.0, atol=1e-4)

    print("KERNEL_OK")
</pallas_src>

<mosaic_0001>
module attributes {stable_mosaic.version = 11 : i64} {
  func.func @kernel(%arg0: i32, %arg1: memref<128x16xbf16, #tpu.memory_space<vmem>>, %arg2: memref<16x128xbf16, #tpu.memory_space<vmem>>, %arg3: memref<1x128xf32, #tpu.memory_space<vmem>>, %arg4: memref<128x128xbf16, #tpu.memory_space<vmem>>, %arg5: memref<1x128xf32, #tpu.memory_space<vmem>>, %arg6: memref<128x128xbf16, #tpu.memory_space<vmem>>, %arg7: memref<1x128xf32, #tpu.memory_space<vmem>>, %arg8: memref<128x128xf32, #tpu.memory_space<vmem>>) attributes {dimension_semantics = [#tpu.dimension_semantics<parallel>], iteration_bounds = array<i64: 2>, scalar_prefetch = 0 : i64, scratch_operands = 0 : i64, tpu.core_type = #tpu.core_type<tc>, window_params = [{transform_indices = @transform_0, window_bounds = array<i64: 128, 16>}, {pipeline_mode = #tpu.pipeline_mode<synchronous>, transform_indices = @transform_1, window_bounds = array<i64: 16, 128>}, {pipeline_mode = #tpu.pipeline_mode<synchronous>, transform_indices = @transform_2, window_bounds = array<i64: 1, 128>}, {pipeline_mode = #tpu.pipeline_mode<synchronous>, transform_indices = @transform_3, window_bounds = array<i64: 128, 128>}, {pipeline_mode = #tpu.pipeline_mode<synchronous>, transform_indices = @transform_4, window_bounds = array<i64: 1, 128>}, {pipeline_mode = #tpu.pipeline_mode<synchronous>, transform_indices = @transform_5, window_bounds = array<i64: 128, 128>}, {pipeline_mode = #tpu.pipeline_mode<synchronous>, transform_indices = @transform_6, window_bounds = array<i64: 1, 128>}, {transform_indices = @transform_7, window_bounds = array<i64: 128, 128>}]} {
    %c0 = arith.constant 0 : index
    %c0_0 = arith.constant 0 : index
    %0 = vector.load %arg1[%c0, %c0_0] : memref<128x16xbf16, #tpu.memory_space<vmem>>, vector<128x16xbf16>
    %c0_1 = arith.constant 0 : index
    %c0_2 = arith.constant 0 : index
    %1 = vector.load %arg2[%c0_1, %c0_2] : memref<16x128xbf16, #tpu.memory_space<vmem>>, vector<16x128xbf16>
    %c0_3 = arith.constant 0 : index
    %c0_4 = arith.constant 0 : index
    %2 = vector.load %arg3[%c0_3, %c0_4] : memref<1x128xf32, #tpu.memory_space<vmem>>, vector<1x128xf32>
    %cst = arith.constant dense<0.000000e+00> : vector<128x128xf32>
    %3 = tpu.matmul %0, %1, %cst {dimension_numbers = #tpu.dot_dimension_numbers<[1], [0], [0], [1], [0, 0, 1, 1], [], []>} : vector<128x16xbf16>, vector<16x128xbf16>, vector<128x128xf32> -> vector<128x128xf32>
    %4 = vector.broadcast %2 : vector<1x128xf32> to vector<128x128xf32>
    %5 = arith.addf %3, %4 : vector<128x128xf32>
    %cst_5 = arith.constant 0.000000e+00 : f32
    %6 = vector.broadcast %cst_5 : f32 to vector<128x128xf32>
    %7 = arith.maximumf %5, %6 : vector<128x128xf32>
    %c0_6 = arith.constant 0 : index
    %c0_7 = arith.constant 0 : index
    %8 = vector.load %arg4[%c0_6, %c0_7] : memref<128x128xbf16, #tpu.memory_space<vmem>>, vector<128x128xbf16>
    %c0_8 = arith.constant 0 : index
    %c0_9 = arith.constant 0 : index
    %9 = vector.load %arg5[%c0_8, %c0_9] : memref<1x128xf32, #tpu.memory_space<vmem>>, vector<1x128xf32>
    %10 = arith.truncf %7 : vector<128x128xf32> to vector<128x128xbf16>
    %cst_10 = arith.constant dense<0.000000e+00> : vector<128x128xf32>
    %11 = tpu.matmul %10, %8, %cst_10 {dimension_numbers = #tpu.dot_dimension_numbers<[1], [0], [0], [1], [0, 0, 1, 1], [], []>} : vector<128x128xbf16>, vector<128x128xbf16>, vector<128x128xf32> -> vector<128x128xf32>
    %12 = vector.broadcast %9 : vector<1x128xf32> to vector<128x128xf32>
    %13 = arith.addf %11, %12 : vector<128x128xf32>
    %cst_11 = arith.constant 0.000000e+00 : f32
    %14 = vector.broadcast %cst_11 : f32 to vector<128x128xf32>
    %15 = arith.maximumf %13, %14 : vector<128x128xf32>
    %c0_12 = arith.constant 0 : index
    %c0_13 = arith.constant 0 : index
    %16 = vector.load %arg6[%c0_12, %c0_13] : memref<128x128xbf16, #tpu.memory_space<vmem>>, vector<128x128xbf16>
    %c0_14 = arith.constant 0 : index
    %c0_15 = arith.constant 0 : index
    %17 = vector.load %arg7[%c0_14, %c0_15] : memref<1x128xf32, #tpu.memory_space<vmem>>, vector<1x128xf32>
    %18 = arith.truncf %15 : vector<128x128xf32> to vector<128x128xbf16>
    %cst_16 = arith.constant dense<0.000000e+00> : vector<128x128xf32>
    %19 = tpu.matmul %18, %16, %cst_16 {dimension_numbers = #tpu.dot_dimension_numbers<[1], [0], [0], [1], [0, 0, 1, 1], [], []>} : vector<128x128xbf16>, vector<128x128xbf16>, vector<128x128xf32> -> vector<128x128xf32>
    %20 = vector.broadcast %17 : vector<1x128xf32> to vector<128x128xf32>
    %21 = arith.addf %19, %20 : vector<128x128xf32>
    %cst_17 = arith.constant dense<0xFF800000> : vector<128xf32>
    %22 = vector.multi_reduction <maximumf>, %21, %cst_17 [1] : vector<128x128xf32> to vector<128xf32>
    %23 = vector.shape_cast %22 : vector<128xf32> to vector<128x1xf32>
    %24 = vector.broadcast %23 : vector<128x1xf32> to vector<128x128xf32>
    %25 = arith.subf %21, %24 : vector<128x128xf32>
    %26 = math.exp %25 : vector<128x128xf32>
    %cst_18 = arith.constant dense<0.000000e+00> : vector<128xf32>
    %27 = vector.multi_reduction <add>, %26, %cst_18 [1] : vector<128x128xf32> to vector<128xf32>
    %28 = vector.shape_cast %27 : vector<128xf32> to vector<128x1xf32>
    %29 = math.log %28 : vector<128x1xf32>
    %30 = vector.broadcast %29 : vector<128x1xf32> to vector<128x128xf32>
    %31 = arith.subf %25, %30 : vector<128x128xf32>
    %c0_19 = arith.constant 0 : index
    %c0_20 = arith.constant 0 : index
    %32 = vector.load %arg8[%c0_19, %c0_20] : memref<128x128xf32, #tpu.memory_space<vmem>>, vector<128x128xf32>
    tpu.vector_store %arg8[%c0_19, %c0_20], %31 {strides = array<i32>} : memref<128x128xf32, #tpu.memory_space<vmem>>, vector<128x128xf32>,
    return
  }
  func.func @transform_0(%arg0: i32) -> (i32, i32) {
    %c0_i32 = arith.constant 0 : i32
    %c0_i32_0 = arith.constant 0 : i32
    return %arg0, %c0_i32 : i32, i32
  }
  func.func @transform_1(%arg0: i32) -> (i32, i32) {
    %c0_i32 = arith.constant 0 : i32
    %c0_i32_0 = arith.constant 0 : i32
    %c0_i32_1 = arith.constant 0 : i32
    return %c0_i32, %c0_i32_0 : i32, i32
  }
  func.func @transform_2(%arg0: i32) -> (i32, i32) {
    %c0_i32 = arith.constant 0 : i32
    %c0_i32_0 = arith.constant 0 : i32
    %c0_i32_1 = arith.constant 0 : i32
    return %c0_i32, %c0_i32_0 : i32, i32
  }
  func.func @transform_3(%arg0: i32) -> (i32, i32) {
    %c0_i32 = arith.constant 0 : i32
    %c0_i32_0 = arith.constant 0 : i32
    %c0_i32_1 = arith.constant 0 : i32
    return %c0_i32, %c0_i32_0 : i32, i32
  }
  func.func @transform_4(%arg0: i32) -> (i32, i32) {
    %c0_i32 = arith.constant 0 : i32
    %c0_i32_0 = arith.constant 0 : i32
    %c0_i32_1 = arith.constant 0 : i32
    return %c0_i32, %c0_i32_0 : i32, i32
  }
  func.func @transform_5(%arg0: i32) -> (i32, i32) {
    %c0_i32 = arith.constant 0 : i32
    %c0_i32_0 = arith.constant 0 : i32
    %c0_i32_1 = arith.constant 0 : i32
    return %c0_i32, %c0_i32_0 : i32, i32
  }
  func.func @transform_6(%arg0: i32) -> (i32, i32) {
    %c0_i32 = arith.constant 0 : i32
    %c0_i32_0 = arith.constant 0 : i32
    %c0_i32_1 = arith.constant 0 : i32
    return %c0_i32, %c0_i32_0 : i32, i32
  }
  func.func @transform_7(%arg0: i32) -> (i32, i32) {
    %c0_i32 = arith.constant 0 : i32
    %c0_i32_0 = arith.constant 0 : i32
    return %arg0, %c0_i32 : i32, i32
  }
}

module attributes {stable_mosaic.version = 11 : i64} {
  func.func @kernel(%arg0: i32, %arg1: memref<128x16xbf16, #tpu.memory_space<vmem>>, %arg2: memref<16x128xbf16, #tpu.memory_space<vmem>>, %arg3: memref<1x128xf32, #tpu.memory_space<vmem>>, %arg4: memref<128x128xbf16, #tpu.memory_space<vmem>>, %arg5: memref<1x128xf32, #tpu.memory_space<vmem>>, %arg6: memref<128x128xbf16, #tpu.memory_space<vmem>>, %arg7: memref<1x128xf32, #tpu.memory_space<vmem>>, %arg8: memref<128x128xf32, #tpu.memory_space<vmem>>) attributes {dimension_semantics = [#tpu.dimension_semantics<parallel>], iteration_bounds = array<i64: 2>, scalar_prefetch = 0 : i64, scratch_operands = 0 : i64, tpu.core_type = #tpu.core_type<tc>, window_params = [{transform_indices = @transform_0, window_bounds = array<i64: 128, 16>}, {pipeline_mode = #tpu.pipeline_mode<synchronous>, transform_indices = @transform_1, window_bounds = array<i64: 16, 128>}, {pipeline_mode = #tpu.pipeline_mode<synchronous>, transform_indices = @transform_2, window_bounds = array<i64: 1, 128>}, {pipeline_mode = #tpu.pipeline_mode<synchronous>, transform_indices = @transform_3, window_bounds = array<i64: 128, 128>}, {pipeline_mode = #tpu.pipeline_mode<synchronous>, transform_indices = @transform_4, window_bounds = array<i64: 1, 128>}, {pipeline_mode = #tpu.pipeline_mode<synchronous>, transform_indices = @transform_5, window_bounds = array<i64: 128, 128>}, {pipeline_mode = #tpu.pipeline_mode<synchronous>, transform_indices = @transform_6, window_bounds = array<i64: 1, 128>}, {transform_indices = @transform_7, window_bounds = array<i64: 128, 128>}]} {
    %c0 = arith.constant 0 : index
    %c0_0 = arith.constant 0 : index
    %0 = vector.load %arg1[%c0, %c0_0] : memref<128x16xbf16, #tpu.memory_space<vmem>>, vector<128x16xbf16>
    %c0_1 = arith.constant 0 : index
    %c0_2 = arith.constant 0 : index
    %1 = vector.load %arg2[%c0_1, %c0_2] : memref<16x128xbf16, #tpu.memory_space<vmem>>, vector<16x128xbf16>
    %c0_3 = arith.constant 0 : index
    %c0_4 = arith.constant 0 : index
    %2 = vector.load %arg3[%c0_3, %c0_4] : memref<1x128xf32, #tpu.memory_space<vmem>>, vector<1x128xf32>
    %cst = arith.constant dense<0.000000e+00> : vector<128x128xf32>
    %3 = tpu.matmul %0, %1, %cst {dimension_numbers = #tpu.dot_dimension_numbers<[1], [0], [0], [1], [0, 0, 1, 1], [], []>} : vector<128x16xbf16>, vector<16x128xbf16>, vector<128x128xf32> -> vector<128x128xf32>
    %4 = vector.broadcast %2 : vector<1x128xf32> to vector<128x128xf32>
    %5 = arith.addf %3, %4 : vector<128x128xf32>
    %cst_5 = arith.constant 0.000000e+00 : f32
    %6 = vector.broadcast %cst_5 : f32 to vector<128x128xf32>
    %7 = arith.maximumf %5, %6 : vector<128x128xf32>
    %c0_6 = arith.constant 0 : index
    %c0_7 = arith.constant 0 : index
    %8 = vector.load %arg4[%c0_6, %c0_7] : memref<128x128xbf16, #tpu.memory_space<vmem>>, vector<128x128xbf16>
    %c0_8 = arith.constant 0 : index
    %c0_9 = arith.constant 0 : index
    %9 = vector.load %arg5[%c0_8, %c0_9] : memref<1x128xf32, #tpu.memory_space<vmem>>, vector<1x128xf32>
    %10 = arith.truncf %7 : vector<128x128xf32> to vector<128x128xbf16>
    %cst_10 = arith.constant dense<0.000000e+00> : vector<128x128xf32>
    %11 = tpu.matmul %10, %8, %cst_10 {dimension_numbers = #tpu.dot_dimension_numbers<[1], [0], [0], [1], [0, 0, 1, 1], [], []>} : vector<128x128xbf16>, vector<128x128xbf16>, vector<128x128xf32> -> vector<128x128xf32>
    %12 = vector.broadcast %9 : vector<1x128xf32> to vector<128x128xf32>
    %13 = arith.addf %11, %12 : vector<128x128xf32>
    %cst_11 = arith.constant 0.000000e+00 : f32
    %14 = vector.broadcast %cst_11 : f32 to vector<128x128xf32>
    %15 = arith.maximumf %13, %14 : vector<128x128xf32>
    %c0_12 = arith.constant 0 : index
    %c0_13 = arith.constant 0 : index
    %16 = vector.load %arg6[%c0_12, %c0_13] : memref<128x128xbf16, #tpu.memory_space<vmem>>, vector<128x128xbf16>
    %c0_14 = arith.constant 0 : index
    %c0_15 = arith.constant 0 : index
    %17 = vector.load %arg7[%c0_14, %c0_15] : memref<1x128xf32, #tpu.memory_space<vmem>>, vector<1x128xf32>
    %18 = arith.truncf %15 : vector<128x128xf32> to vector<128x128xbf16>
    %cst_16 = arith.constant dense<0.000000e+00> : vector<128x128xf32>
    %19 = tpu.matmul %18, %16, %cst_16 {dimension_numbers = #tpu.dot_dimension_numbers<[1], [0], [0], [1], [0, 0, 1, 1], [], []>} : vector<128x128xbf16>, vector<128x128xbf16>, vector<128x128xf32> -> vector<128x128xf32>
    %20 = vector.broadcast %17 : vector<1x128xf32> to vector<128x128xf32>
    %21 = arith.addf %19, %20 : vector<128x128xf32>
    %cst_17 = arith.constant dense<0xFF800000> : vector<128xf32>
    %22 = vector.multi_reduction <maximumf>, %21, %cst_17 [1] : vector<128x128xf32> to vector<128xf32>
    %23 = vector.shape_cast %22 : vector<128xf32> to vector<128x1xf32>
    %24 = vector.broadcast %23 : vector<128x1xf32> to vector<128x128xf32>
    %25 = arith.subf %21, %24 : vector<128x128xf32>
    %26 = math.exp %25 : vector<128x128xf32>
    %cst_18 = arith.constant dense<0.000000e+00> : vector<128xf32>
    %27 = vector.multi_reduction <add>, %26, %cst_18 [1] : vector<128x128xf32> to vector<128xf32>
    %28 = vector.shape_cast %27 : vector<128xf32> to vector<128x1xf32>
    %29 = math.log %28 : vector<128x1xf32>
    %30 = vector.broadcast %29 : vector<128x1xf32> to vector<128x128xf32>
    %31 = arith.subf %25, %30 : vector<128x128xf32>
    %c0_19 = arith.constant 0 : index
    %c0_20 = arith.constant 0 : index
    %32 = vector.load %arg8[%c0_19, %c0_20] : memref<128x128xf32, #tpu.memory_space<vmem>>, vector<128x128xf32>
    tpu.vector_store %arg8[%c0_19, %c0_20], %31 {strides = array<i32>} : memref<128x128xf32, #tpu.memory_space<vmem>>, vector<128x128xf32>,
    return
  }
  func.func @transform_0(%arg0: i32) -> (i32, i32) {
    %c0_i32 = arith.constant 0 : i32
    %c0_i32_0 = arith.constant 0 : i32
    return %arg0, %c0_i32 : i32, i32
  }
  func.func @transform_1(%arg0: i32) -> (i32, i32) {
    %c0_i32 = arith.constant 0 : i32
    %c0_i32_0 = arith.constant 0 : i32
    %c0_i32_1 = arith.constant 0 : i32
    return %c0_i32, %c0_i32_0 : i32, i32
  }
  func.func @transform_2(%arg0: i32) -> (i32, i32) {
    %c0_i32 = arith.constant 0 : i32
    %c0_i32_0 = arith.constant 0 : i32
    %c0_i32_1 = arith.constant 0 : i32
    return %c0_i32, %c0_i32_0 : i32, i32
  }
  func.func @transform_3(%arg0: i32) -> (i32, i32) {
    %c0_i32 = arith.constant 0 : i32
    %c0_i32_0 = arith.constant 0 : i32
    %c0_i32_1 = arith.constant 0 : i32
    return %c0_i32, %c0_i32_0 : i32, i32
  }
  func.func @transform_4(%arg0: i32) -> (i32, i32) {
    %c0_i32 = arith.constant 0 : i32
    %c0_i32_0 = arith.constant 0 : i32
    %c0_i32_1 = arith.constant 0 : i32
    return %c0_i32, %c0_i32_0 : i32, i32
  }
  func.func @transform_5(%arg0: i32) -> (i32, i32) {
    %c0_i32 = arith.constant 0 : i32
    %c0_i32_0 = arith.constant 0 : i32
    %c0_i32_1 = arith.constant 0 : i32
    return %c0_i32, %c0_i32_0 : i32, i32
  }
  func.func @transform_6(%arg0: i32) -> (i32, i32) {
    %c0_i32 = arith.constant 0 : i32
    %c0_i32_0 = arith.constant 0 : i32
    %c0_i32_1 = arith.constant 0 : i32
    return %c0_i32, %c0_i32_0 : i32, i32
  }
  func.func @transform_7(%arg0: i32) -> (i32, i32) {
    %c0_i32 = arith.constant 0 : i32
    %c0_i32_0 = arith.constant 0 : i32
    return %arg0, %c0_i32 : i32, i32
  }
}

</mosaic_0001>

<llo_original>
// kernel: mlp_forward.1
$region0: #{mlp_forward.1}
  #allocation0 [shape = 'u32[]', space=smem, size = 0x4, offset = 0x4, fixed_abs, tag = 'smem constant byte address 0x4 - core index']
  #allocation1 [shape = 'u32[144,128]{1,0:T(1,128)}', space=vmem, size = 0x12000, scoped, tag = 'internal scratch']
  %s0 = inlined_call_operand.vmem [shape: bf16[256,16], index: 0, kind: input, shape index: {}]
  %s1 = inlined_call_operand.vmem [shape: bf16[16,128], index: 1, kind: input, shape index: {}]
  %s2 = inlined_call_operand.vmem [shape: f32[1,128], index: 2, kind: input, shape index: {}]
  %s3 = inlined_call_operand.vmem [shape: bf16[128,128], index: 3, kind: input, shape index: {}]
  %s4 = inlined_call_operand.vmem [shape: f32[1,128], index: 4, kind: input, shape index: {}]
  %s5 = inlined_call_operand.vmem [shape: bf16[128,128], index: 5, kind: input, shape index: {}]
  %s6 = inlined_call_operand.vmem [shape: f32[1,128], index: 6, kind: input, shape index: {}]
  %s7 = inlined_call_operand.vmem [shape: f32[256,128], index: 7, kind: output, shape index: {}]
  %s8 = sld [smem:[#allocation0]]
  $region61: #{mlp_forward.1} parent=0
    _
  %s10 = ssub.s32 1, %s8
  %s11 = scalar_select 0, %s10, %s8
  loop: start=0, step=1, limit=4
  $region2: #{mlp_forward.1} parent=0 // loop_pre_header
    _
  $region3: #{mlp_forward.1} parent=0 // loop_header
    %s13 = sphi 0, %s17
    %p14 = scmp.ge.s32.totalorder %s13, 4
    %s23 = sphi 0, %s25
    %s26 = sphi 0, %s23
    %s27 = sphi 0, %s26
    %s43 = sphi 0, %s27
    %s47 = sphi 0, %s47
    %s49 = sphi 0, %s47
    %s50 = sphi 0, %s49
    %s64 = sphi 0, %s50
    %s68 = sphi 0, %s68
    %s70 = sphi 0, %s68
    %s71 = sphi 0, %s70
    %s85 = sphi 0, %s71
    %s89 = sphi 0, %s89
    %s91 = sphi 0, %s89
    %s92 = sphi 0, %s91
    %s106 = sphi 0, %s92
    %s110 = sphi 0, %s110
    %s112 = sphi 0, %s110
    %s113 = sphi 0, %s112
    %s127 = sphi 0, %s113
    %s131 = sphi 0, %s131
    %s133 = sphi 0, %s131
    %s134 = sphi 0, %s133
    %s148 = sphi 0, %s134
    %s152 = sphi 0, %s152
    %s154 = sphi 0, %s152
    %s155 = sphi 0, %s154
    %s169 = sphi 0, %s155
    %s175 = sphi 0, %s177
    %s178 = sphi 0, %s175
    %s179 = sphi 0, %s178
    %s195 = sphi 0, %s179
  $region4: #{mlp_forward.1} parent=0 // loop_header_branch
    %16 = sbr.rel (%p14) target = $region8
  $region5: #{mlp_forward.1} parent=0 // loop_body
    %s18 = ssub.s32 %s13, 1
    %s19 = ssub.s32 %s13, 2
    %s20 = sadd.s32 %s13, 1
    %s21 = ssub.s32 %s13, %s20
    %p22 = scmp.eq.s32.totalorder %s21, 0
    %s24 = sadd.s32 %s23, 1
    %s25 = scalar_select %p22, %s23, %s24
    %p28 = pneg %p22
    %p29 = scmp.eq.s32.totalorder %s13, 1
    %p30 = por %p28, %p29
    %p31 = scmp.ne.s32.totalorder %s23, %s26
    %p32 = scmp.eq.s32.totalorder %s13, 0
    %p33 = por %p31, %p32
    %p34 = scmp.ne.s32.totalorder %s23, %s26
    %p35 = scmp.eq.s32.totalorder %s18, 1
    %p36 = por %p34, %p35
    %p37 = scmp.ne.s32.totalorder %s26, %s27
    %p38 = scmp.eq.s32.totalorder %s18, 0
    %p39 = por %p37, %p38
    %p40 = scmp.ne.s32.totalorder %s26, %s27
    %p41 = scmp.eq.s32.totalorder %s19, 1
    %p42 = por %p40, %p41
    %p44 = scmp.ne.s32.totalorder %s27, %s43
    %p45 = scmp.eq.s32.totalorder %s19, 0
    %p46 = por %p44, %p45
    %s48 = sadd.s32 %s47, 1
    %p51 = scmp.eq.s32.totalorder %s13, 1
    %p52 = scmp.ne.s32.totalorder %s47, %s49
    %p53 = scmp.eq.s32.totalorder %s13, 0
    %p54 = por %p52, %p53
    %p55 = scmp.ne.s32.totalorder %s47, %s49
    %p56 = scmp.eq.s32.totalorder %s18, 1
    %p57 = por %p55, %p56
    %p58 = scmp.ne.s32.totalorder %s49, %s50
    %p59 = scmp.eq.s32.totalorder %s18, 0
    %p60 = por %p58, %p59
    %p61 = scmp.ne.s32.totalorder %s49, %s50
    %p62 = scmp.eq.s32.totalorder %s19, 1
    %p63 = por %p61, %p62
    %p65 = scmp.ne.s32.totalorder %s50, %s64
    %p66 = scmp.eq.s32.totalorder %s19, 0
    %p67 = por %p65, %p66
    %s69 = sadd.s32 %s68, 1
    %p72 = scmp.eq.s32.totalorder %s13, 1
    %p73 = scmp.ne.s32.totalorder %s68, %s70
    %p74 = scmp.eq.s32.totalorder %s13, 0
    %p75 = por %p73, %p74
    %p76 = scmp.ne.s32.totalorder %s68, %s70
    %p77 = scmp.eq.s32.totalorder %s18, 1
    %p78 = por %p76, %p77
    %p79 = scmp.ne.s32.totalorder %s70, %s71
    %p80 = scmp.eq.s32.totalorder %s18, 0
    %p81 = por %p79, %p80
    %p82 = scmp.ne.s32.totalorder %s70, %s71
    %p83 = scmp.eq.s32.totalorder %s19, 1
    %p84 = por %p82, %p83
    %p86 = scmp.ne.s32.totalorder %s71, %s85
    %p87 = scmp.eq.s32.totalorder %s19, 0
    %p88 = por %p86, %p87
    %s90 = sadd.s32 %s89, 1
    %p93 = scmp.eq.s32.totalorder %s13, 1
    %p94 = scmp.ne.s32.totalorder %s89, %s91
    %p95 = scmp.eq.s32.totalorder %s13, 0
    %p96 = por %p94, %p95
    %p97 = scmp.ne.s32.totalorder %s89, %s91
    %p98 = scmp.eq.s32.totalorder %s18, 1
    %p99 = por %p97, %p98
    %p100 = scmp.ne.s32.totalorder %s91, %s92
    %p101 = scmp.eq.s32.totalorder %s18, 0
    %p102 = por %p100, %p101
    %p103 = scmp.ne.s32.totalorder %s91, %s92
    %p104 = scmp.eq.s32.totalorder %s19, 1
    %p105 = por %p103, %p104
    %p107 = scmp.ne.s32.totalorder %s92, %s106
    %p108 = scmp.eq.s32.totalorder %s19, 0
    %p109 = por %p107, %p108
    %s111 = sadd.s32 %s110, 1
    %p114 = scmp.eq.s32.totalorder %s13, 1
    %p115 = scmp.ne.s32.totalorder %s110, %s112
    %p116 = scmp.eq.s32.totalorder %s13, 0
    %p117 = por %p115, %p116
    %p118 = scmp.ne.s32.totalorder %s110, %s112
    %p119 = scmp.eq.s32.totalorder %s18, 1
    %p120 = por %p118, %p119
    %p121 = scmp.ne.s32.totalorder %s112, %s113
    %p122 = scmp.eq.s32.totalorder %s18, 0
    %p123 = por %p121, %p122
    %p124 = scmp.ne.s32.totalorder %s112, %s113
    %p125 = scmp.eq.s32.totalorder %s19, 1
    %p126 = por %p124, %p125
    %p128 = scmp.ne.s32.totalorder %s113, %s127
    %p129 = scmp.eq.s32.totalorder %s19, 0
    %p130 = por %p128, %p129
    %s132 = sadd.s32 %s131, 1
    %p135 = scmp.eq.s32.totalorder %s13, 1
    %p136 = scmp.ne.s32.totalorder %s131, %s133
    %p137 = scmp.eq.s32.totalorder %s13, 0
    %p138 = por %p136, %p137
    %p139 = scmp.ne.s32.totalorder %s131, %s133
    %p140 = scmp.eq.s32.totalorder %s18, 1
    %p141 = por %p139, %p140
    %p142 = scmp.ne.s32.totalorder %s133, %s134
    %p143 = scmp.eq.s32.totalorder %s18, 0
    %p144 = por %p142, %p143
    %p145 = scmp.ne.s32.totalorder %s133, %s134
    %p146 = scmp.eq.s32.totalorder %s19, 1
    %p147 = por %p145, %p146
    %p149 = scmp.ne.s32.totalorder %s134, %s148
    %p150 = scmp.eq.s32.totalorder %s19, 0
    %p151 = por %p149, %p150
    %s153 = sadd.s32 %s152, 1
    %p156 = scmp.eq.s32.totalorder %s13, 1
    %p157 = scmp.ne.s32.totalorder %s152, %s154
    %p158 = scmp.eq.s32.totalorder %s13, 0
    %p159 = por %p157, %p158
    %p160 = scmp.ne.s32.totalorder %s152, %s154
    %p161 = scmp.eq.s32.totalorder %s18, 1
    %p162 = por %p160, %p161
    %p163 = scmp.ne.s32.totalorder %s154, %s155
    %p164 = scmp.eq.s32.totalorder %s18, 0
    %p165 = por %p163, %p164
    %p166 = scmp.ne.s32.totalorder %s154, %s155
    %p167 = scmp.eq.s32.totalorder %s19, 1
    %p168 = por %p166, %p167
    %p170 = scmp.ne.s32.totalorder %s155, %s169
    %p171 = scmp.eq.s32.totalorder %s19, 0
    %p172 = por %p170, %p171
    %s173 = ssub.s32 %s13, %s20
    %p174 = scmp.eq.s32.totalorder %s173, 0
    %s176 = sadd.s32 %s175, 1
    %s177 = scalar_select %p174, %s175, %s176
    %p180 = pneg %p174
    %p181 = scmp.eq.s32.totalorder %s13, 1
    %p182 = por %p180, %p181
    %p183 = scmp.ne.s32.totalorder %s175, %s178
    %p184 = scmp.eq.s32.totalorder %s13, 0
    %p185 = por %p183, %p184
    %p186 = scmp.ne.s32.totalorder %s175, %s178
    %p187 = scmp.eq.s32.totalorder %s18, 1
    %p188 = por %p186, %p187
    %p189 = scmp.ne.s32.totalorder %s178, %s179
    %p190 = scmp.eq.s32.totalorder %s18, 0
    %p191 = por %p189, %p190
    %p192 = scmp.ne.s32.totalorder %s178, %s179
    %p193 = scmp.eq.s32.totalorder %s19, 1
    %p194 = por %p192, %p193
    %p196 = scmp.ne.s32.totalorder %s179, %s195
    %p197 = scmp.eq.s32.totalorder %s19, 0
    %p198 = por %p196, %p197
    %p199 = scmp.le.s32.totalorder 1, %s13
    %p200 = scmp.lt.s32.totalorder %s13, 3
    %p201 = pnand %p199, %p200
    %p202 = pneg %p201
    // Predicated region
    $region9: #{mlp_forward.1} parent=5 // pred_check
      _
    $region10: #{mlp_forward.1} parent=5 // pred_check_branch
      %204 = sbr.rel (%p201) target = $region12
    $region11: #{mlp_forward.1} parent=5 // pred_region
      %s205 = ssub.s32 %s13, 1
      // Predicated region
      $region13: #{mlp_forward.1} parent=11 // pred_check
        %p206 = pneg %p60
      $region14: #{mlp_forward.1} parent=11 // pred_check_branch
        %208 = sbr.rel (%p206) target = $region16
      $region15: #{mlp_forward.1} parent=11 // pred_region
        _
      $region16: #{mlp_forward.1} parent=11 // pred_fallthru
        _
      // Predicated region
      $region17: #{mlp_forward.1} parent=11 // pred_check
        %p209 = pneg %p81
      $region18: #{mlp_forward.1} parent=11 // pred_check_branch
        %211 = sbr.rel (%p209) target = $region20
      $region19: #{mlp_forward.1} parent=11 // pred_region
        _
      $region20: #{mlp_forward.1} parent=11 // pred_fallthru
        _
      // Predicated region
      $region21: #{mlp_forward.1} parent=11 // pred_check
        %p212 = pneg %p102
      $region22: #{mlp_forward.1} parent=11 // pred_check_branch
        %214 = sbr.rel (%p212) target = $region24
      $region23: #{mlp_forward.1} parent=11 // pred_region
        _
      $region24: #{mlp_forward.1} parent=11 // pred_fallthru
        _
      // Predicated region
      $region25: #{mlp_forward.1} parent=11 // pred_check
        %p215 = pneg %p123
      $region26: #{mlp_forward.1} parent=11 // pred_check_branch
        %217 = sbr.rel (%p215) target = $region28
      $region27: #{mlp_forward.1} parent=11 // pred_region
        _
      $region28: #{mlp_forward.1} parent=11 // pred_fallthru
        _
      // Predicated region
      $region29: #{mlp_forward.1} parent=11 // pred_check
        %p218 = pneg %p144
      $region30: #{mlp_forward.1} parent=11 // pred_check_branch
        %220 = sbr.rel (%p218) target = $region32
      $region31: #{mlp_forward.1} parent=11 // pred_region
        _
      $region32: #{mlp_forward.1} parent=11 // pred_fallthru
        _
      // Predicated region
      $region33: #{mlp_forward.1} parent=11 // pred_check
        %p221 = pneg %p165
      $region34: #{mlp_forward.1} parent=11 // pred_check_branch
        %223 = sbr.rel (%p221) target = $region36
      $region35: #{mlp_forward.1} parent=11 // pred_region
        _
      $region36: #{mlp_forward.1} parent=11 // pred_fallthru
        _
    $region12: #{mlp_forward.1} parent=5 // pred_fallthru
      _
    %p224 = scmp.lt.s32.totalorder %s13, 2
    // Predicated region
    $region37: #{mlp_forward.1} parent=5 // pred_check
      %p225 = pneg %p224
    $region38: #{mlp_forward.1} parent=5 // pred_check_branch
      %227 = sbr.rel (%p225) target = $region40
    $region39: #{mlp_forward.1} parent=5 // pred_region
      // Predicated region
      $region41: #{mlp_forward.1} parent=39 // pred_check
        %p228 = pneg %p33
      $region42: #{mlp_forward.1} parent=39 // pred_check_branch
        %230 = sbr.rel (%p228) target = $region44
      $region43: #{mlp_forward.1} parent=39 // pred_region
        %s231 = smul.u32 16, %s13
        %p232 = scmp.lt.s32.totalorder %s231, 31
        %s233 = scalar_select %p232, %s231, 31
        %s234 = smul.addr %s233, 4
        %s235 = scalar_lea.vmem %s0, %s234
        %s236 = smul.u32 16, %s13
      $region44: #{mlp_forward.1} parent=39 // pred_fallthru
        _
    $region40: #{mlp_forward.1} parent=5 // pred_fallthru
      _
    %p237 = scmp.le.s32.totalorder 1, %s13
    %p238 = scmp.lt.s32.totalorder %s13, 3
    %p239 = pnand %p237, %p238
    %p240 = pneg %p239
    // Predicated region
    $region45: #{mlp_forward.1} parent=5 // pred_check
      _
    $region46: #{mlp_forward.1} parent=5 // pred_check_branch
      %242 = sbr.rel (%p239) target = $region48
    $region47: #{mlp_forward.1} parent=5 // pred_region
      %s243 = ssub.s32 %s13, 1
      %s244 = smul.u32 16, %s18
      %p245 = scmp.lt.s32.totalorder %s244, 31
      %s246 = scalar_select %p245, %s244, 31
      %s247 = smul.addr %s246, 4
      %s248 = scalar_lea.vmem %s0, %s247
      %p249 = pneg %p39
      %p250 = pneg %p36
      %p251 = pneg %p60
      %p252 = pneg %p57
      %p253 = pneg %p81
      %p254 = pneg %p78
      %p255 = pneg %p102
      %p256 = pneg %p99
      %p257 = pneg %p123
      %p258 = pneg %p120
      %p259 = pneg %p144
      %p260 = pneg %p141
      %p261 = pneg %p165
      %p262 = pneg %p162
      %p263 = pneg %p191
      %p264 = pneg %p188
      %s265 = smul.u32 16, %s18
      %p266 = scmp.lt.s32.totalorder %s265, 31
      %s267 = scalar_select %p266, %s265, 31
      %s268 = smul.addr %s267, 8
      %s269 = scalar_lea.vmem %s7, %s268
      %s270 = smul.u32 16, %s18
      %p271 = scmp.lt.s32.totalorder %s270, 31
      %s272 = scalar_select %p271, %s270, 31
      %s273 = smul.addr %s272, 4
      %s274 = scalar_lea.vmem %s0, %s273
      %s275 = smul.u32 16, %s18
      %s276 = smul.u32 16, %s18
      %p277 = scmp.lt.s32.totalorder %s276, 31
      %s278 = scalar_select %p277, %s276, 31
      %s279 = smul.addr %s278, 8
      %s280 = scalar_lea.vmem %s7, %s279
      %s281 = smul.u32 16, %s18
      %v283 = vld [vmem:[%s274] sm:$0xf]
      %v284 = vld [vmem:[%s274 + $0x4] sm:$0xf]
      %v285 = vld [vmem:[%s274 + $0x8] sm:$0xf]
      %v286 = vld [vmem:[%s274 + $0xc] sm:$0xf]
      %v287 = vld [vmem:[%s274 + $0x10] sm:$0xf]
      %v288 = vld [vmem:[%s274 + $0x14] sm:$0xf]
      %v289 = vld [vmem:[%s274 + $0x18] sm:$0xf]
      %v290 = vld [vmem:[%s274 + $0x1c] sm:$0xf]
      %v291 = vld [vmem:[%s274 + $0x20] sm:$0xf]
      %v292 = vld [vmem:[%s274 + $0x24] sm:$0xf]
      %v293 = vld [vmem:[%s274 + $0x28] sm:$0xf]
      %v294 = vld [vmem:[%s274 + $0x2c] sm:$0xf]
      %v295 = vld [vmem:[%s274 + $0x30] sm:$0xf]
      %v296 = vld [vmem:[%s274 + $0x34] sm:$0xf]
      %v297 = vld [vmem:[%s274 + $0x38] sm:$0xf]
      %v298 = vld [vmem:[%s274 + $0x3c] sm:$0xf]
      %v299 = vld [vmem:[%s1] sm:$0xf]
      %v300 = vld [vmem:[%s1 + $0x4] sm:$0xf]
      %v301 = vld [vmem:[%s2] sm:$0x1]
      %v303 = vlaneseq
      %v304 = vshrl.u32 %v303, 7
      %v305 = vsub.s32 0, %v304
      %v306 = vrot.slane %v301, %v305
      %v324 = vunpack.c.l.b16 %v283
      %v325 = vunpack.c.l.b16 %v284
      %v326 = vunpack.c.l.b16 %v285
      %v327 = vunpack.c.l.b16 %v286
      %v328 = vunpack.c.l.b16 %v287
      %v329 = vunpack.c.l.b16 %v288
      %v330 = vunpack.c.l.b16 %v289
      %v331 = vunpack.c.l.b16 %v290
      %v332 = vunpack.c.l.b16 %v291
      %v333 = vunpack.c.l.b16 %v292
      %v334 = vunpack.c.l.b16 %v293
      %v335 = vunpack.c.l.b16 %v294
      %v336 = vunpack.c.l.b16 %v295
      %v337 = vunpack.c.l.b16 %v296
      %v338 = vunpack.c.l.b16 %v297
      %v339 = vunpack.c.l.b16 %v298
      %v340 = vpack.c.b16 %v325, %v324
      %v341 = vpack.c.b16 %v327, %v326
      %v342 = vpack.c.b16 %v329, %v328
      %v343 = vpack.c.b16 %v331, %v330
      %v344 = vpack.c.b16 %v333, %v332
      %v345 = vpack.c.b16 %v335, %v334
      %v346 = vpack.c.b16 %v337, %v336
      %v347 = vpack.c.b16 %v339, %v338
      %v350 = vunpack.c.l.b16 %v299
      %v351 = vunpack.c.l.b16 %v300
      %v352 = vpack.c.b16 %v351, %v350
      %vm354 = vcmask 130048
      %v356 = vsel %vm354, %v340, 0
      %v359 = vsel %vm354, %v341, 0
      %v362 = vsel %vm354, %v342, 0
      %v365 = vsel %vm354, %v343, 0
      %v368 = vsel %vm354, %v344, 0
      %v371 = vsel %vm354, %v345, 0
      %v374 = vsel %vm354, %v346, 0
      %v377 = vsel %vm354, %v347, 0
      %379 = vmatprep.subr.bf16.mxu0 0
      %380 = vmatpush1.bf16.msra.mxu0 %v352
      %381 = vmatprep.subr.bf16.mxu0 0
      %382 = vmatpush1.bf16.msra.mxu0 0
      %383 = vmatprep.subr.bf16.mxu0 0
      %384 = vmatpush1.bf16.msra.mxu0 0
      %385 = vmatprep.subr.bf16.mxu0 0
      %386 = vmatpush1.bf16.msra.mxu0 0
      %387 = vmatprep.subr.bf16.mxu0 0
      %388 = vmatpush1.bf16.msra.mxu0 0
      %389 = vmatprep.subr.bf16.mxu0 0
      %390 = vmatpush1.bf16.msra.mxu0 0
      %391 = vmatprep.subr.bf16.mxu0 0
      %392 = vmatpush1.bf16.msra.mxu0 0
      %393 = vmatprep.subr.bf16.mxu0 0
      %394 = vmatpush1.bf16.msra.mxu0 0
      %395 = vmatprep.subr.bf16.mxu0 0
      %396 = vmatpush1.bf16.msra.mxu0 0
      %397 = vmatprep.subr.bf16.mxu0 0
      %398 = vmatpush1.bf16.msra.mxu0 0
      %399 = vmatprep.subr.bf16.mxu0 0
      %400 = vmatpush1.bf16.msra.mxu0 0
      %401 = vmatprep.subr.bf16.mxu0 0
      %402 = vmatpush1.bf16.msra.mxu0 0
      %403 = vmatprep.subr.bf16.mxu0 0
      %404 = vmatpush1.bf16.msra.mxu0 0
      %405 = vmatprep.subr.bf16.mxu0 0
      %406 = vmatpush1.bf16.msra.mxu0 0
      %407 = vmatprep.subr.bf16.mxu0 0
      %408 = vmatpush1.bf16.msra.mxu0 0
      %409 = vmatprep.subr.bf16.mxu0 0
      %410 = vmatpush1.bf16.msra.mxu0 0
      %411 = vmatprep.mubr.bf16.mxu0 0
      %412 = vmatmul.mubr.bf16.gmra.mrb[0].mxu0 %v356
      %v413 = vpop.f32.mrb[0].mxu0
      %v414 = vadd.f32 %v306, %v413
      %v415 = vpop.f32.mrb[0].mxu0
      %v416 = vpop.f32.mrb[0].mxu0
      %v417 = vadd.f32 %v306, %v416
      %v418 = vpop.f32.mrb[0].mxu0
      %419 = vmatprep.mubr.bf16.mxu0 0
      %420 = vmatmul.mubr.bf16.gmra.mrb[0].mxu0 %v359
      %v421 = vpop.f32.mrb[0].mxu0
      %v422 = vadd.f32 %v306, %v421
      %v423 = vpop.f32.mrb[0].mxu0
      %v424 = vpop.f32.mrb[0].mxu0
      %v425 = vadd.f32 %v306, %v424
      %v426 = vpop.f32.mrb[0].mxu0
      %427 = vmatprep.mubr.bf16.mxu0 0
      %428 = vmatmul.mubr.bf16.gmra.mrb[0].mxu0 %v362
      %v429 = vpop.f32.mrb[0].mxu0
      %v430 = vadd.f32 %v306, %v429
      %v431 = vpop.f32.mrb[0].mxu0
      %v432 = vpop.f32.mrb[0].mxu0
      %v433 = vadd.f32 %v306, %v432
      %v434 = vpop.f32.mrb[0].mxu0
      %435 = vmatprep.mubr.bf16.mxu0 0
      %436 = vmatmul.mubr.bf16.gmra.mrb[0].mxu0 %v365
      %v437 = vpop.f32.mrb[0].mxu0
      %v438 = vadd.f32 %v306, %v437
      %v439 = vpop.f32.mrb[0].mxu0
      %v440 = vpop.f32.mrb[0].mxu0
      %v441 = vadd.f32 %v306, %v440
      %v442 = vpop.f32.mrb[0].mxu0
      %443 = vmatprep.mubr.bf16.mxu0 0
      %444 = vmatmul.mubr.bf16.gmra.mrb[0].mxu0 %v368
      %v445 = vpop.f32.mrb[0].mxu0
      %v446 = vadd.f32 %v306, %v445
      %v447 = vpop.f32.mrb[0].mxu0
      %v448 = vpop.f32.mrb[0].mxu0
      %v449 = vadd.f32 %v306, %v448
      %v450 = vpop.f32.mrb[0].mxu0
      %451 = vmatprep.mubr.bf16.mxu0 0
      %452 = vmatmul.mubr.bf16.gmra.mrb[0].mxu0 %v371
      %v453 = vpop.f32.mrb[0].mxu0
      %v454 = vadd.f32 %v306, %v453
      %v455 = vpop.f32.mrb[0].mxu0
      %v456 = vpop.f32.mrb[0].mxu0
      %v457 = vadd.f32 %v306, %v456
      %v458 = vpop.f32.mrb[0].mxu0
      %459 = vmatprep.mubr.bf16.mxu0 0
      %460 = vmatmul.mubr.bf16.gmra.mrb[0].mxu0 %v374
      %v461 = vpop.f32.mrb[0].mxu0
      %v462 = vadd.f32 %v306, %v461
      %v463 = vpop.f32.mrb[0].mxu0
      %v464 = vpop.f32.mrb[0].mxu0
      %v465 = vadd.f32 %v306, %v464
      %v466 = vpop.f32.mrb[0].mxu0
      %467 = vmatprep.mubr.bf16.mxu0 0
      %468 = vmatmul.mubr.bf16.gmra.mrb[0].mxu0 %v377
      %v469 = vpop.f32.mrb[0].mxu0
      %v470 = vadd.f32 %v306, %v469
      %v471 = vpop.f32.mrb[0].mxu0
      %v472 = vpop.f32.mrb[0].mxu0
      %v473 = vadd.f32 %v306, %v472
      %v474 = vpop.f32.mrb[0].mxu0
      %475 = vdwg.mxu0
      %v476 = vmax.f32 %v414, 0.0
      %v477 = vmax.f32 %v417, 0.0
      %v478 = vmax.f32 %v422, 0.0
      %v479 = vmax.f32 %v425, 0.0
      %v480 = vmax.f32 %v430, 0.0
      %v481 = vmax.f32 %v433, 0.0
      %v482 = vmax.f32 %v438, 0.0
      %v483 = vmax.f32 %v441, 0.0
      %v484 = vmax.f32 %v446, 0.0
      %v485 = vmax.f32 %v449, 0.0
      %v486 = vmax.f32 %v454, 0.0
      %v487 = vmax.f32 %v457, 0.0
      %v488 = vmax.f32 %v462, 0.0
      %v489 = vmax.f32 %v465, 0.0
      %v490 = vmax.f32 %v470, 0.0
      %v491 = vmax.f32 %v473, 0.0
      %v492 = vld [vmem:[%s3] sm:$0xf]
      %v493 = vld [vmem:[%s3 + $0x4] sm:$0xf]
      %v494 = vld [vmem:[%s3 + $0x8] sm:$0xf]
      %v495 = vld [vmem:[%s3 + $0xc] sm:$0xf]
      %v496 = vld [vmem:[%s3 + $0x10] sm:$0xf]
      %v497 = vld [vmem:[%s3 + $0x14] sm:$0xf]
      %v498 = vld [vmem:[%s3 + $0x18] sm:$0xf]
      %v499 = vld [vmem:[%s3 + $0x1c] sm:$0xf]
      %v500 = vld [vmem:[%s3 + $0x20] sm:$0xf]
      %v501 = vld [vmem:[%s3 + $0x24] sm:$0xf]
      %v502 = vld [vmem:[%s3 + $0x28] sm:$0xf]
      %v503 = vld [vmem:[%s3 + $0x2c] sm:$0xf]
      %v504 = vld [vmem:[%s3 + $0x30] sm:$0xf]
      %v505 = vld [vmem:[%s3 + $0x34] sm:$0xf]
      %v506 = vld [vmem:[%s3 + $0x38] sm:$0xf]
      %v507 = vld [vmem:[%s3 + $0x3c] sm:$0xf]
      %v508 = vld [vmem:[%s4] sm:$0x1]
      %v509 = vpack.c.bf16 %v477, %v476
      %v510 = vpack.c.bf16 %v479, %v478
      %v511 = vpack.c.bf16 %v481, %v480
      %v512 = vpack.c.bf16 %v483, %v482
      %v513 = vpack.c.bf16 %v485, %v484
      %v514 = vpack.c.bf16 %v487, %v486
      %v515 = vpack.c.bf16 %v489, %v488
      %v516 = vpack.c.bf16 %v491, %v490
      %v518 = vlaneseq
      %v519 = vshrl.u32 %v518, 7
      %v520 = vsub.s32 0, %v519
      %v521 = vrot.slane %v508, %v520
      %v539 = vunpack.c.l.b16 %v492
      %v540 = vunpack.c.l.b16 %v493
      %v541 = vunpack.c.l.b16 %v494
      %v542 = vunpack.c.l.b16 %v495
      %v543 = vunpack.c.l.b16 %v496
      %v544 = vunpack.c.l.b16 %v497
      %v545 = vunpack.c.l.b16 %v498
      %v546 = vunpack.c.l.b16 %v499
      %v547 = vunpack.c.l.b16 %v500
      %v548 = vunpack.c.l.b16 %v501
      %v549 = vunpack.c.l.b16 %v502
      %v550 = vunpack.c.l.b16 %v503
      %v551 = vunpack.c.l.b16 %v504
      %v552 = vunpack.c.l.b16 %v505
      %v553 = vunpack.c.l.b16 %v506
      %v554 = vunpack.c.l.b16 %v507
      %v555 = vpack.c.b16 %v540, %v539
      %v556 = vpack.c.b16 %v542, %v541
      %v557 = vpack.c.b16 %v544, %v543
      %v558 = vpack.c.b16 %v546, %v545
      %v559 = vpack.c.b16 %v548, %v547
      %v560 = vpack.c.b16 %v550, %v549
      %v561 = vpack.c.b16 %v552, %v551
      %v562 = vpack.c.b16 %v554, %v553
      %571 = vmatprep.subr.bf16.mxu0 0
      %572 = vmatpush1.bf16.msra.mxu0 %v555
      %573 = vmatprep.subr.bf16.mxu0 0
      %574 = vmatpush1.bf16.msra.mxu0 %v556
      %575 = vmatprep.subr.bf16.mxu0 0
      %576 = vmatpush1.bf16.msra.mxu0 %v557
      %577 = vmatprep.subr.bf16.mxu0 0
      %578 = vmatpush1.bf16.msra.mxu0 %v558
      %579 = vmatprep.subr.bf16.mxu0 0
      %580 = vmatpush1.bf16.msra.mxu0 %v559
      %581 = vmatprep.subr.bf16.mxu0 0
      %582 = vmatpush1.bf16.msra.mxu0 %v560
      %583 = vmatprep.subr.bf16.mxu0 0
      %584 = vmatpush1.bf16.msra.mxu0 %v561
      %585 = vmatprep.subr.bf16.mxu0 0
      %586 = vmatpush1.bf16.msra.mxu0 %v562
      %587 = vmatprep.subr.bf16.mxu0 0
      %588 = vmatpush1.bf16.msra.mxu0 0
      %589 = vmatprep.subr.bf16.mxu0 0
      %590 = vmatpush1.bf16.msra.mxu0 0
      %591 = vmatprep.subr.bf16.mxu0 0
      %592 = vmatpush1.bf16.msra.mxu0 0
      %593 = vmatprep.subr.bf16.mxu0 0
      %594 = vmatpush1.bf16.msra.mxu0 0
      %595 = vmatprep.subr.bf16.mxu0 0
      %596 = vmatpush1.bf16.msra.mxu0 0
      %597 = vmatprep.subr.bf16.mxu0 0
      %598 = vmatpush1.bf16.msra.mxu0 0
      %599 = vmatprep.subr.bf16.mxu0 0
      %600 = vmatpush1.bf16.msra.mxu0 0
      %601 = vmatprep.subr.bf16.mxu0 0
      %602 = vmatpush1.bf16.msra.mxu0 0
      %603 = vmatprep.mubr.bf16.mxu0 0
      %604 = vmatmul.mubr.bf16.gmra.mrb[0].mxu0 %v509
      %v605 = vpop.f32.mrb[0].mxu0
      %v606 = vadd.f32 %v521, %v605
      %v607 = vpop.f32.mrb[0].mxu0
      %v608 = vpop.f32.mrb[0].mxu0
      %v609 = vadd.f32 %v521, %v608
      %v610 = vpop.f32.mrb[0].mxu0
      %611 = vmatprep.mubr.bf16.mxu0 0
      %612 = vmatmul.mubr.bf16.gmra.mrb[0].mxu0 %v510
      %v613 = vpop.f32.mrb[0].mxu0
      %v614 = vadd.f32 %v521, %v613
      %v615 = vpop.f32.mrb[0].mxu0
      %v616 = vpop.f32.mrb[0].mxu0
      %v617 = vadd.f32 %v521, %v616
      %v618 = vpop.f32.mrb[0].mxu0
      %619 = vmatprep.mubr.bf16.mxu0 0
      %620 = vmatmul.mubr.bf16.gmra.mrb[0].mxu0 %v511
      %v621 = vpop.f32.mrb[0].mxu0
      %v622 = vadd.f32 %v521, %v621
      %v623 = vpop.f32.mrb[0].mxu0
      %v624 = vpop.f32.mrb[0].mxu0
      %v625 = vadd.f32 %v521, %v624
      %v626 = vpop.f32.mrb[0].mxu0
      %627 = vmatprep.mubr.bf16.mxu0 0
      %628 = vmatmul.mubr.bf16.gmra.mrb[0].mxu0 %v512
      %v629 = vpop.f32.mrb[0].mxu0
      %v630 = vadd.f32 %v521, %v629
      %v631 = vpop.f32.mrb[0].mxu0
      %v632 = vpop.f32.mrb[0].mxu0
      %v633 = vadd.f32 %v521, %v632
      %v634 = vpop.f32.mrb[0].mxu0
      %635 = vmatprep.mubr.bf16.mxu0 0
      %636 = vmatmul.mubr.bf16.gmra.mrb[0].mxu0 %v513
      %v637 = vpop.f32.mrb[0].mxu0
      %v638 = vadd.f32 %v521, %v637
      %v639 = vpop.f32.mrb[0].mxu0
      %v640 = vpop.f32.mrb[0].mxu0
      %v641 = vadd.f32 %v521, %v640
      %v642 = vpop.f32.mrb[0].mxu0
      %643 = vmatprep.mubr.bf16.mxu0 0
      %644 = vmatmul.mubr.bf16.gmra.mrb[0].mxu0 %v514
      %v645 = vpop.f32.mrb[0].mxu0
      %v646 = vadd.f32 %v521, %v645
      %v647 = vpop.f32.mrb[0].mxu0
      %v648 = vpop.f32.mrb[0].mxu0
      %v649 = vadd.f32 %v521, %v648
      %v650 = vpop.f32.mrb[0].mxu0
      %651 = vmatprep.mubr.bf16.mxu0 0
      %652 = vmatmul.mubr.bf16.gmra.mrb[0].mxu0 %v515
      %v653 = vpop.f32.mrb[0].mxu0
      %v654 = vadd.f32 %v521, %v653
      %v655 = vpop.f32.mrb[0].mxu0
      %v656 = vpop.f32.mrb[0].mxu0
      %v657 = vadd.f32 %v521, %v656
      %v658 = vpop.f32.mrb[0].mxu0
      %659 = vmatprep.mubr.bf16.mxu0 0
      %660 = vmatmul.mubr.bf16.gmra.mrb[0].mxu0 %v516
      %v661 = vpop.f32.mrb[0].mxu0
      %v662 = vadd.f32 %v521, %v661
      %v663 = vpop.f32.mrb[0].mxu0
      %v664 = vpop.f32.mrb[0].mxu0
      %v665 = vadd.f32 %v521, %v664
      %v666 = vpop.f32.mrb[0].mxu0
      %667 = vdwg.mxu0
      %v668 = vmax.f32 %v606, 0.0
      %v669 = vmax.f32 %v609, 0.0
      %v670 = vmax.f32 %v614, 0.0
      %v671 = vmax.f32 %v617, 0.0
      %v672 = vmax.f32 %v622, 0.0
      %v673 = vmax.f32 %v625, 0.0
      %v674 = vmax.f32 %v630, 0.0
      %v675 = vmax.f32 %v633, 0.0
      %v676 = vmax.f32 %v638, 0.0
      %v677 = vmax.f32 %v641, 0.0
      %v678 = vmax.f32 %v646, 0.0
      %v679 = vmax.f32 %v649, 0.0
      %v680 = vmax.f32 %v654, 0.0
      %v681 = vmax.f32 %v657, 0.0
      %v682 = vmax.f32 %v662, 0.0
      %v683 = vmax.f32 %v665, 0.0
      %v684 = vld [vmem:[%s5] sm:$0xf]
      %v685 = vld [vmem:[%s5 + $0x4] sm:$0xf]
      %v686 = vld [vmem:[%s5 + $0x8] sm:$0xf]
      %v687 = vld [vmem:[%s5 + $0xc] sm:$0xf]
      %v688 = vld [vmem:[%s5 + $0x10] sm:$0xf]
      %v689 = vld [vmem:[%s5 + $0x14] sm:$0xf]
      %v690 = vld [vmem:[%s5 + $0x18] sm:$0xf]
      %v691 = vld [vmem:[%s5 + $0x1c] sm:$0xf]
      %v692 = vld [vmem:[%s5 + $0x20] sm:$0xf]
      %v693 = vld [vmem:[%s5 + $0x24] sm:$0xf]
      %v694 = vld [vmem:[%s5 + $0x28] sm:$0xf]
      %v695 = vld [vmem:[%s5 + $0x2c] sm:$0xf]
      %v696 = vld [vmem:[%s5 + $0x30] sm:$0xf]
      %v697 = vld [vmem:[%s5 + $0x34] sm:$0xf]
      %v698 = vld [vmem:[%s5 + $0x38] sm:$0xf]
      %v699 = vld [vmem:[%s5 + $0x3c] sm:$0xf]
      %v700 = vld [vmem:[%s6] sm:$0x1]
      %v701 = vpack.c.bf16 %v669, %v668
      %v702 = vpack.c.bf16 %v671, %v670
      %v703 = vpack.c.bf16 %v673, %v672
      %v704 = vpack.c.bf16 %v675, %v674
      %v705 = vpack.c.bf16 %v677, %v676
      %v706 = vpack.c.bf16 %v679, %v678
      %v707 = vpack.c.bf16 %v681, %v680
      %v708 = vpack.c.bf16 %v683, %v682
      %v710 = vlaneseq
      %v711 = vshrl.u32 %v710, 7
      %v712 = vsub.s32 0, %v711
      %v713 = vrot.slane %v700, %v712
      %v731 = vunpack.c.l.b16 %v684
      %v732 = vunpack.c.l.b16 %v685
      %v733 = vunpack.c.l.b16 %v686
      %v734 = vunpack.c.l.b16 %v687
      %v735 = vunpack.c.l.b16 %v688
      %v736 = vunpack.c.l.b16 %v689
      %v737 = vunpack.c.l.b16 %v690
      %v738 = vunpack.c.l.b16 %v691
      %v739 = vunpack.c.l.b16 %v692
      %v740 = vunpack.c.l.b16 %v693
      %v741 = vunpack.c.l.b16 %v694
      %v742 = vunpack.c.l.b16 %v695
      %v743 = vunpack.c.l.b16 %v696
      %v744 = vunpack.c.l.b16 %v697
      %v745 = vunpack.c.l.b16 %v698
      %v746 = vunpack.c.l.b16 %v699
      %v747 = vpack.c.b16 %v732, %v731
      %v748 = vpack.c.b16 %v734, %v733
      %v749 = vpack.c.b16 %v736, %v735
      %v750 = vpack.c.b16 %v738, %v737
      %v751 = vpack.c.b16 %v740, %v739
      %v752 = vpack.c.b16 %v742, %v741
      %v753 = vpack.c.b16 %v744, %v743
      %v754 = vpack.c.b16 %v746, %v745
      %763 = vmatprep.subr.bf16.mxu0 0
      %764 = vmatpush1.bf16.msra.mxu0 %v747
      %765 = vmatprep.subr.bf16.mxu0 0
      %766 = vmatpush1.bf16.msra.mxu0 %v748
      %767 = vmatprep.subr.bf16.mxu0 0
      %768 = vmatpush1.bf16.msra.mxu0 %v749
      %769 = vmatprep.subr.bf16.mxu0 0
      %770 = vmatpush1.bf16.msra.mxu0 %v750
      %771 = vmatprep.subr.bf16.mxu0 0
      %772 = vmatpush1.bf16.msra.mxu0 %v751
      %773 = vmatprep.subr.bf16.mxu0 0
      %774 = vmatpush1.bf16.msra.mxu0 %v752
      %775 = vmatprep.subr.bf16.mxu0 0
      %776 = vmatpush1.bf16.msra.mxu0 %v753
      %777 = vmatprep.subr.bf16.mxu0 0
      %778 = vmatpush1.bf16.msra.mxu0 %v754
      %779 = vmatprep.subr.bf16.mxu0 0
      %780 = vmatpush1.bf16.msra.mxu0 0
      %781 = vmatprep.subr.bf16.mxu0 0
      %782 = vmatpush1.bf16.msra.mxu0 0
      %783 = vmatprep.subr.bf16.mxu0 0
      %784 = vmatpush1.bf16.msra.mxu0 0
      %785 = vmatprep.subr.bf16.mxu0 0
      %786 = vmatpush1.bf16.msra.mxu0 0
      %787 = vmatprep.subr.bf16.mxu0 0
      %788 = vmatpush1.bf16.msra.mxu0 0
      %789 = vmatprep.subr.bf16.mxu0 0
      %790 = vmatpush1.bf16.msra.mxu0 0
      %791 = vmatprep.subr.bf16.mxu0 0
      %792 = vmatpush1.bf16.msra.mxu0 0
      %793 = vmatprep.subr.bf16.mxu0 0
      %794 = vmatpush1.bf16.msra.mxu0 0
      %795 = vmatprep.mubr.bf16.mxu0 0
      %796 = vmatmul.mubr.bf16.gmra.mrb[0].mxu0 %v701
      %v797 = vpop.f32.mrb[0].mxu0
      %v798 = vadd.f32 %v713, %v797
      %v799 = vpop.f32.mrb[0].mxu0
      %v800 = vpop.f32.mrb[0].mxu0
      %v801 = vadd.f32 %v713, %v800
      %v802 = vpop.f32.mrb[0].mxu0
      %803 = vmatprep.mubr.bf16.mxu0 0
      %804 = vmatmul.mubr.bf16.gmra.mrb[0].mxu0 %v702
      %v805 = vpop.f32.mrb[0].mxu0
      %v806 = vadd.f32 %v713, %v805
      %v807 = vpop.f32.mrb[0].mxu0
      %v808 = vpop.f32.mrb[0].mxu0
      %v809 = vadd.f32 %v713, %v808
      %v810 = vpop.f32.mrb[0].mxu0
      %811 = vmatprep.mubr.bf16.mxu0 0
      %812 = vmatmul.mubr.bf16.gmra.mrb[0].mxu0 %v703
      %v813 = vpop.f32.mrb[0].mxu0
      %v814 = vadd.f32 %v713, %v813
      %v815 = vpop.f32.mrb[0].mxu0
      %v816 = vpop.f32.mrb[0].mxu0
      %v817 = vadd.f32 %v713, %v816
      %v818 = vpop.f32.mrb[0].mxu0
      %819 = vmatprep.mubr.bf16.mxu0 0
      %820 = vmatmul.mubr.bf16.gmra.mrb[0].mxu0 %v704
      %v821 = vpop.f32.mrb[0].mxu0
      %v822 = vadd.f32 %v713, %v821
      %v823 = vpop.f32.mrb[0].mxu0
      %v824 = vpop.f32.mrb[0].mxu0
      %v825 = vadd.f32 %v713, %v824
      %v826 = vpop.f32.mrb[0].mxu0
      %827 = vmatprep.mubr.bf16.mxu0 0
      %828 = vmatmul.mubr.bf16.gmra.mrb[0].mxu0 %v705
      %v829 = vpop.f32.mrb[0].mxu0
      %v830 = vadd.f32 %v713, %v829
      %v831 = vpop.f32.mrb[0].mxu0
      %v832 = vpop.f32.mrb[0].mxu0
      %v833 = vadd.f32 %v713, %v832
      %v834 = vpop.f32.mrb[0].mxu0
      %835 = vmatprep.mubr.bf16.mxu0 0
      %836 = vmatmul.mubr.bf16.gmra.mrb[0].mxu0 %v706
      %v837 = vpop.f32.mrb[0].mxu0
      %v838 = vadd.f32 %v713, %v837
      %v839 = vpop.f32.mrb[0].mxu0
      %v840 = vpop.f32.mrb[0].mxu0
      %v841 = vadd.f32 %v713, %v840
      %v842 = vpop.f32.mrb[0].mxu0
      %843 = vmatprep.mubr.bf16.mxu0 0
      %844 = vmatmul.mubr.bf16.gmra.mrb[0].mxu0 %v707
      %v845 = vpop.f32.mrb[0].mxu0
      %v846 = vadd.f32 %v713, %v845
      %v847 = vpop.f32.mrb[0].mxu0
      %v848 = vpop.f32.mrb[0].mxu0
      %v849 = vadd.f32 %v713, %v848
      %v850 = vpop.f32.mrb[0].mxu0
      %851 = vmatprep.mubr.bf16.mxu0 0
      %852 = vmatmul.mubr.bf16.gmra.mrb[0].mxu0 %v708
      %v853 = vpop.f32.mrb[0].mxu0
      %v854 = vadd.f32 %v713, %v853
      %v855 = vpop.f32.mrb[0].mxu0
      %v856 = vpop.f32.mrb[0].mxu0
      %v857 = vadd.f32 %v713, %v856
      %v858 = vpop.f32.mrb[0].mxu0
      %859 = vdwg.mxu0
      %860 = vmax.xlane.f32.xlu0 %v798
      %v861 = vpop.xlane.xlu0 %860
      %862 = vmax.xlane.f32.xlu0 %v801
      %v863 = vpop.xlane.xlu0 %862
      %864 = vmax.xlane.f32.xlu0 %v806
      %v865 = vpop.xlane.xlu0 %864
      %866 = vmax.xlane.f32.xlu0 %v809
      %v867 = vpop.xlane.xlu0 %866
      %868 = vmax.xlane.f32.xlu0 %v814
      %v869 = vpop.xlane.xlu0 %868
      %870 = vmax.xlane.f32.xlu0 %v817
      %v871 = vpop.xlane.xlu0 %870
      %872 = vmax.xlane.f32.xlu0 %v822
      %v873 = vpop.xlane.xlu0 %872
      %874 = vmax.xlane.f32.xlu0 %v825
      %v875 = vpop.xlane.xlu0 %874
      %876 = vmax.xlane.f32.xlu0 %v830
      %v877 = vpop.xlane.xlu0 %876
      %878 = vmax.xlane.f32.xlu0 %v833
      %v879 = vpop.xlane.xlu0 %878
      %880 = vmax.xlane.f32.xlu0 %v838
      %v881 = vpop.xlane.xlu0 %880
      %882 = vmax.xlane.f32.xlu0 %v841
      %v883 = vpop.xlane.xlu0 %882
      %884 = vmax.xlane.f32.xlu0 %v846
      %v885 = vpop.xlane.xlu0 %884
      %886 = vmax.xlane.f32.xlu0 %v849
      %v887 = vpop.xlane.xlu0 %886
      %888 = vmax.xlane.f32.xlu0 %v854
      %v889 = vpop.xlane.xlu0 %888
      %890 = vmax.xlane.f32.xlu0 %v857
      %v891 = vpop.xlane.xlu0 %890
      %v892 = vsub.f32 %v798, %v861
      %v893 = vsub.f32 %v801, %v863
      %v894 = vsub.f32 %v806, %v865
      %v895 = vsub.f32 %v809, %v867
      %v896 = vsub.f32 %v814, %v869
      %v897 = vsub.f32 %v817, %v871
      %v898 = vsub.f32 %v822, %v873
      %v899 = vsub.f32 %v825, %v875
      %v900 = vsub.f32 %v830, %v877
      %v901 = vsub.f32 %v833, %v879
      %v902 = vsub.f32 %v838, %v881
      %v903 = vsub.f32 %v841, %v883
      %v904 = vsub.f32 %v846, %v885
      %v905 = vsub.f32 %v849, %v887
      %v906 = vsub.f32 %v854, %v889
      %v907 = vsub.f32 %v857, %v891
      %v908 = vmul.f32 %v892, 1.442695
      %v909 = vpow.pop %v908
      %v910 = vmul.f32 %v893, 1.442695
      %v911 = vpow.pop %v910
      %v912 = vmul.f32 %v894, 1.442695
      %v913 = vpow.pop %v912
      %v914 = vmul.f32 %v895, 1.442695
      %v915 = vpow.pop %v914
      %v916 = vmul.f32 %v896, 1.442695
      %v917 = vpow.pop %v916
      %v918 = vmul.f32 %v897, 1.442695
      %v919 = vpow.pop %v918
      %v920 = vmul.f32 %v898, 1.442695
      %v921 = vpow.pop %v920
      %v922 = vmul.f32 %v899, 1.442695
      %v923 = vpow.pop %v922
      %v924 = vmul.f32 %v900, 1.442695
      %v925 = vpow.pop %v924
      %v926 = vmul.f32 %v901, 1.442695
      %v927 = vpow.pop %v926
      %v928 = vmul.f32 %v902, 1.442695
      %v929 = vpow.pop %v928
      %v930 = vmul.f32 %v903, 1.442695
      %v931 = vpow.pop %v930
      %v932 = vmul.f32 %v904, 1.442695
      %v933 = vpow.pop %v932
      %v934 = vmul.f32 %v905, 1.442695
      %v935 = vpow.pop %v934
      %v936 = vmul.f32 %v906, 1.442695
      %v937 = vpow.pop %v936
      %v938 = vmul.f32 %v907, 1.442695
      %v939 = vpow.pop %v938
      %940 = vadd.xlane.f32.xlu0 %v909
      %v941 = vpop.xlane.xlu0 %940
      %942 = vadd.xlane.f32.xlu0 %v911
      %v943 = vpop.xlane.xlu0 %942
      %944 = vadd.xlane.f32.xlu0 %v913
      %v945 = vpop.xlane.xlu0 %944
      %946 = vadd.xlane.f32.xlu0 %v915
      %v947 = vpop.xlane.xlu0 %946
      %948 = vadd.xlane.f32.xlu0 %v917
      %v949 = vpop.xlane.xlu0 %948
      %950 = vadd.xlane.f32.xlu0 %v919
      %v951 = vpop.xlane.xlu0 %950
      %952 = vadd.xlane.f32.xlu0 %v921
      %v953 = vpop.xlane.xlu0 %952
      %954 = vadd.xlane.f32.xlu0 %v923
      %v955 = vpop.xlane.xlu0 %954
      %956 = vadd.xlane.f32.xlu0 %v925
      %v957 = vpop.xlane.xlu0 %956
      %958 = vadd.xlane.f32.xlu0 %v927
      %v959 = vpop.xlane.xlu0 %958
      %960 = vadd.xlane.f32.xlu0 %v929
      %v961 = vpop.xlane.xlu0 %960
      %962 = vadd.xlane.f32.xlu0 %v931
      %v963 = vpop.xlane.xlu0 %962
      %964 = vadd.xlane.f32.xlu0 %v933
      %v965 = vpop.xlane.xlu0 %964
      %966 = vadd.xlane.f32.xlu0 %v935
      %v967 = vpop.xlane.xlu0 %966
      %968 = vadd.xlane.f32.xlu0 %v937
      %v969 = vpop.xlane.xlu0 %968
      %970 = vadd.xlane.f32.xlu0 %v939
      %v971 = vpop.xlane.xlu0 %970
      %v972 = vlog2.pop %v941
      %v973 = vmul.f32 %v972, 0.6931472
      %v974 = vlog2.pop %v943
      %v975 = vmul.f32 %v974, 0.6931472
      %v976 = vlog2.pop %v945
      %v977 = vmul.f32 %v976, 0.6931472
      %v978 = vlog2.pop %v947
      %v979 = vmul.f32 %v978, 0.6931472
      %v980 = vlog2.pop %v949
      %v981 = vmul.f32 %v980, 0.6931472
      %v982 = vlog2.pop %v951
      %v983 = vmul.f32 %v982, 0.6931472
      %v984 = vlog2.pop %v953
      %v985 = vmul.f32 %v984, 0.6931472
      %v986 = vlog2.pop %v955
      %v987 = vmul.f32 %v986, 0.6931472
      %v988 = vlog2.pop %v957
      %v989 = vmul.f32 %v988, 0.6931472
      %v990 = vlog2.pop %v959
      %v991 = vmul.f32 %v990, 0.6931472
      %v992 = vlog2.pop %v961
      %v993 = vmul.f32 %v992, 0.6931472
      %v994 = vlog2.pop %v963
      %v995 = vmul.f32 %v994, 0.6931472
      %v996 = vlog2.pop %v965
      %v997 = vmul.f32 %v996, 0.6931472
      %v998 = vlog2.pop %v967
      %v999 = vmul.f32 %v998, 0.6931472
      %v1000 = vlog2.pop %v969
      %v1001 = vmul.f32 %v1000, 0.6931472
      %v1002 = vlog2.pop %v971
      %v1003 = vmul.f32 %v1002, 0.6931472
      %v1004 = vsub.f32 %v892, %v973
      %v1005 = vsub.f32 %v893, %v975
      %v1006 = vsub.f32 %v894, %v977
      %v1007 = vsub.f32 %v895, %v979
      %v1008 = vsub.f32 %v896, %v981
      %v1009 = vsub.f32 %v897, %v983
      %v1010 = vsub.f32 %v898, %v985
      %v1011 = vsub.f32 %v899, %v987
      %v1012 = vsub.f32 %v900, %v989
      %v1013 = vsub.f32 %v901, %v991
      %v1014 = vsub.f32 %v902, %v993
      %v1015 = vsub.f32 %v903, %v995
      %v1016 = vsub.f32 %v904, %v997
      %v1017 = vsub.f32 %v905, %v999
      %v1018 = vsub.f32 %v906, %v1001
      %v1019 = vsub.f32 %v907, %v1003
      %1020 = vst [vmem:[%s280] sm:$0xff] %v1004
      %1021 = vst [vmem:[%s280 + $0x8] sm:$0xff] %v1005
      %1022 = vst [vmem:[%s280 + $0x10] sm:$0xff] %v1006
      %1023 = vst [vmem:[%s280 + $0x18] sm:$0xff] %v1007
      %1024 = vst [vmem:[%s280 + $0x20] sm:$0xff] %v1008
      %1025 = vst [vmem:[%s280 + $0x28] sm:$0xff] %v1009
      %1026 = vst [vmem:[%s280 + $0x30] sm:$0xff] %v1010
      %1027 = vst [vmem:[%s280 + $0x38] sm:$0xff] %v1011
      %1028 = vst [vmem:[%s280 + $0x40] sm:$0xff] %v1012
      %1029 = vst [vmem:[%s280 + $0x48] sm:$0xff] %v1013
      %1030 = vst [vmem:[%s280 + $0x50] sm:$0xff] %v1014
      %1031 = vst [vmem:[%s280 + $0x58] sm:$0xff] %v1015
      %1032 = vst [vmem:[%s280 + $0x60] sm:$0xff] %v1016
      %1033 = vst [vmem:[%s280 + $0x68] sm:$0xff] %v1017
      %1034 = vst [vmem:[%s280 + $0x70] sm:$0xff] %v1018
      %1035 = vst [vmem:[%s280 + $0x78] sm:$0xff] %v1019
      %s1036 = smul.u32 16, %s18
      %p1037 = scmp.lt.s32.totalorder %s1036, 31
      %s1038 = scalar_select %p1037, %s1036, 31
      %s1039 = smul.addr %s1038, 8
      %s1040 = scalar_lea.vmem %s7, %s1039
      // Predicated region
      $region49: #{mlp_forward.1} parent=47 // pred_check
        %p1041 = pneg %p188
      $region50: #{mlp_forward.1} parent=47 // pred_check_branch
        %1043 = sbr.rel (%p1041) target = $region52
      $region51: #{mlp_forward.1} parent=47 // pred_region
        %s1044 = smul.u32 16, %s18
      $region52: #{mlp_forward.1} parent=47 // pred_fallthru
        _
    $region48: #{mlp_forward.1} parent=5 // pred_fallthru
      _
    %p1045 = scmp.le.s32.totalorder 2, %s13
    // Predicated region
    $region53: #{mlp_forward.1} parent=5 // pred_check
      %p1046 = pneg %p1045
    $region54: #{mlp_forward.1} parent=5 // pred_check_branch
      %1048 = sbr.rel (%p1046) target = $region56
    $region55: #{mlp_forward.1} parent=5 // pred_region
      %s1049 = ssub.s32 %s13, 2
      // Predicated region
      $region57: #{mlp_forward.1} parent=55 // pred_check
        %p1050 = pneg %p194
      $region58: #{mlp_forward.1} parent=55 // pred_check_branch
        %1052 = sbr.rel (%p1050) target = $region60
      $region59: #{mlp_forward.1} parent=55 // pred_region
        %s1053 = smul.u32 16, %s19
        %p1054 = scmp.lt.s32.totalorder %s1053, 31
        %s1055 = scalar_select %p1054, %s1053, 31
        %s1056 = smul.addr %s1055, 8
        %s1057 = scalar_lea.vmem %s7, %s1056
      $region60: #{mlp_forward.1} parent=55 // pred_fallthru
        _
    $region56: #{mlp_forward.1} parent=5 // pred_fallthru
      _
  $region6: #{mlp_forward.1} parent=0 // loop_footer
    %s17 = sadd.s32 1, %s13
  $region7: #{mlp_forward.1} parent=0 // loop_footer_branch
    %12 = sbr.rel target = $region3
  $region8: #{mlp_forward.1} parent=0 // loop_exit
    _

// kernel: mlp_forward.1
$region0: #{mlp_forward.1}
  #allocation0 [shape = 'u32[]', space=smem, size = 0x4, offset = 0x4, fixed_abs, tag = 'smem constant byte address 0x4 - core index']
  #allocation1 [shape = 'u32[144,128]{1,0:T(1,128)}', space=vmem, size = 0x12000, scoped, tag = 'internal scratch']
  %s0 = inlined_call_operand.vmem [shape: bf16[256,16], index: 0, kind: input, shape index: {}]
  %s1 = inlined_call_operand.vmem [shape: bf16[16,128], index: 1, kind: input, shape index: {}]
  %s2 = inlined_call_operand.vmem [shape: f32[1,128], index: 2, kind: input, shape index: {}]
  %s3 = inlined_call_operand.vmem [shape: bf16[128,128], index: 3, kind: input, shape index: {}]
  %s4 = inlined_call_operand.vmem [shape: f32[1,128], index: 4, kind: input, shape index: {}]
  %s5 = inlined_call_operand.vmem [shape: bf16[128,128], index: 5, kind: input, shape index: {}]
  %s6 = inlined_call_operand.vmem [shape: f32[1,128], index: 6, kind: input, shape index: {}]
  %s7 = inlined_call_operand.vmem [shape: f32[256,128], index: 7, kind: output, shape index: {}]
  %s8 = sld [smem:[#allocation0]]
  $region61: #{mlp_forward.1} parent=0
    _
  %s10 = ssub.s32 1, %s8
  %s11 = scalar_select 0, %s10, %s8
  loop: start=0, step=1, limit=4
  $region2: #{mlp_forward.1} parent=0 // loop_pre_header
    _
  $region3: #{mlp_forward.1} parent=0 // loop_header
    %s13 = sphi 0, %s17
    %p14 = scmp.ge.s32.totalorder %s13, 4
    %s23 = sphi 0, %s25
    %s26 = sphi 0, %s23
    %s27 = sphi 0, %s26
    %s43 = sphi 0, %s27
    %s47 = sphi 0, %s47
    %s49 = sphi 0, %s47
    %s50 = sphi 0, %s49
    %s64 = sphi 0, %s50
    %s68 = sphi 0, %s68
    %s70 = sphi 0, %s68
    %s71 = sphi 0, %s70
    %s85 = sphi 0, %s71
    %s89 = sphi 0, %s89
    %s91 = sphi 0, %s89
    %s92 = sphi 0, %s91
    %s106 = sphi 0, %s92
    %s110 = sphi 0, %s110
    %s112 = sphi 0, %s110
    %s113 = sphi 0, %s112
    %s127 = sphi 0, %s113
    %s131 = sphi 0, %s131
    %s133 = sphi 0, %s131
    %s134 = sphi 0, %s133
    %s148 = sphi 0, %s134
    %s152 = sphi 0, %s152
    %s154 = sphi 0, %s152
    %s155 = sphi 0, %s154
    %s169 = sphi 0, %s155
    %s175 = sphi 0, %s177
    %s178 = sphi 0, %s175
    %s179 = sphi 0, %s178
    %s195 = sphi 0, %s179
  $region4: #{mlp_forward.1} parent=0 // loop_header_branch
    %16 = sbr.rel (%p14) target = $region8
  $region5: #{mlp_forward.1} parent=0 // loop_body
    %s18 = ssub.s32 %s13, 1
    %s19 = ssub.s32 %s13, 2
    %s20 = sadd.s32 %s13, 1
    %s21 = ssub.s32 %s13, %s20
    %p22 = scmp.eq.s32.totalorder %s21, 0
    %s24 = sadd.s32 %s23, 1
    %s25 = scalar_select %p22, %s23, %s24
    %p28 = pneg %p22
    %p29 = scmp.eq.s32.totalorder %s13, 1
    %p30 = por %p28, %p29
    %p31 = scmp.ne.s32.totalorder %s23, %s26
    %p32 = scmp.eq.s32.totalorder %s13, 0
    %p33 = por %p31, %p32
    %p34 = scmp.ne.s32.totalorder %s23, %s26
    %p35 = scmp.eq.s32.totalorder %s18, 1
    %p36 = por %p34, %p35
    %p37 = scmp.ne.s32.totalorder %s26, %s27
    %p38 = scmp.eq.s32.totalorder %s18, 0
    %p39 = por %p37, %p38
    %p40 = scmp.ne.s32.totalorder %s26, %s27
    %p41 = scmp.eq.s32.totalorder %s19, 1
    %p42 = por %p40, %p41
    %p44 = scmp.ne.s32.totalorder %s27, %s43
    %p45 = scmp.eq.s32.totalorder %s19, 0
    %p46 = por %p44, %p45
    %s48 = sadd.s32 %s47, 1
    %p51 = scmp.eq.s32.totalorder %s13, 1
    %p52 = scmp.ne.s32.totalorder %s47, %s49
    %p53 = scmp.eq.s32.totalorder %s13, 0
    %p54 = por %p52, %p53
    %p55 = scmp.ne.s32.totalorder %s47, %s49
    %p56 = scmp.eq.s32.totalorder %s18, 1
    %p57 = por %p55, %p56
    %p58 = scmp.ne.s32.totalorder %s49, %s50
    %p59 = scmp.eq.s32.totalorder %s18, 0
    %p60 = por %p58, %p59
    %p61 = scmp.ne.s32.totalorder %s49, %s50
    %p62 = scmp.eq.s32.totalorder %s19, 1
    %p63 = por %p61, %p62
    %p65 = scmp.ne.s32.totalorder %s50, %s64
    %p66 = scmp.eq.s32.totalorder %s19, 0
    %p67 = por %p65, %p66
    %s69 = sadd.s32 %s68, 1
    %p72 = scmp.eq.s32.totalorder %s13, 1
    %p73 = scmp.ne.s32.totalorder %s68, %s70
    %p74 = scmp.eq.s32.totalorder %s13, 0
    %p75 = por %p73, %p74
    %p76 = scmp.ne.s32.totalorder %s68, %s70
    %p77 = scmp.eq.s32.totalorder %s18, 1
    %p78 = por %p76, %p77
    %p79 = scmp.ne.s32.totalorder %s70, %s71
    %p80 = scmp.eq.s32.totalorder %s18, 0
    %p81 = por %p79, %p80
    %p82 = scmp.ne.s32.totalorder %s70, %s71
    %p83 = scmp.eq.s32.totalorder %s19, 1
    %p84 = por %p82, %p83
    %p86 = scmp.ne.s32.totalorder %s71, %s85
    %p87 = scmp.eq.s32.totalorder %s19, 0
    %p88 = por %p86, %p87
    %s90 = sadd.s32 %s89, 1
    %p93 = scmp.eq.s32.totalorder %s13, 1
    %p94 = scmp.ne.s32.totalorder %s89, %s91
    %p95 = scmp.eq.s32.totalorder %s13, 0
    %p96 = por %p94, %p95
    %p97 = scmp.ne.s32.totalorder %s89, %s91
    %p98 = scmp.eq.s32.totalorder %s18, 1
    %p99 = por %p97, %p98
    %p100 = scmp.ne.s32.totalorder %s91, %s92
    %p101 = scmp.eq.s32.totalorder %s18, 0
    %p102 = por %p100, %p101
    %p103 = scmp.ne.s32.totalorder %s91, %s92
    %p104 = scmp.eq.s32.totalorder %s19, 1
    %p105 = por %p103, %p104
    %p107 = scmp.ne.s32.totalorder %s92, %s106
    %p108 = scmp.eq.s32.totalorder %s19, 0
    %p109 = por %p107, %p108
    %s111 = sadd.s32 %s110, 1
    %p114 = scmp.eq.s32.totalorder %s13, 1
    %p115 = scmp.ne.s32.totalorder %s110, %s112
    %p116 = scmp.eq.s32.totalorder %s13, 0
    %p117 = por %p115, %p116
    %p118 = scmp.ne.s32.totalorder %s110, %s112
    %p119 = scmp.eq.s32.totalorder %s18, 1
    %p120 = por %p118, %p119
    %p121 = scmp.ne.s32.totalorder %s112, %s113
    %p122 = scmp.eq.s32.totalorder %s18, 0
    %p123 = por %p121, %p122
    %p124 = scmp.ne.s32.totalorder %s112, %s113
    %p125 = scmp.eq.s32.totalorder %s19, 1
    %p126 = por %p124, %p125
    %p128 = scmp.ne.s32.totalorder %s113, %s127
    %p129 = scmp.eq.s32.totalorder %s19, 0
    %p130 = por %p128, %p129
    %s132 = sadd.s32 %s131, 1
    %p135 = scmp.eq.s32.totalorder %s13, 1
    %p136 = scmp.ne.s32.totalorder %s131, %s133
    %p137 = scmp.eq.s32.totalorder %s13, 0
    %p138 = por %p136, %p137
    %p139 = scmp.ne.s32.totalorder %s131, %s133
    %p140 = scmp.eq.s32.totalorder %s18, 1
    %p141 = por %p139, %p140
    %p142 = scmp.ne.s32.totalorder %s133, %s134
    %p143 = scmp.eq.s32.totalorder %s18, 0
    %p144 = por %p142, %p143
    %p145 = scmp.ne.s32.totalorder %s133, %s134
    %p146 = scmp.eq.s32.totalorder %s19, 1
    %p147 = por %p145, %p146
    %p149 = scmp.ne.s32.totalorder %s134, %s148
    %p150 = scmp.eq.s32.totalorder %s19, 0
    %p151 = por %p149, %p150
    %s153 = sadd.s32 %s152, 1
    %p156 = scmp.eq.s32.totalorder %s13, 1
    %p157 = scmp.ne.s32.totalorder %s152, %s154
    %p158 = scmp.eq.s32.totalorder %s13, 0
    %p159 = por %p157, %p158
    %p160 = scmp.ne.s32.totalorder %s152, %s154
    %p161 = scmp.eq.s32.totalorder %s18, 1
    %p162 = por %p160, %p161
    %p163 = scmp.ne.s32.totalorder %s154, %s155
    %p164 = scmp.eq.s32.totalorder %s18, 0
    %p165 = por %p163, %p164
    %p166 = scmp.ne.s32.totalorder %s154, %s155
    %p167 = scmp.eq.s32.totalorder %s19, 1
    %p168 = por %p166, %p167
    %p170 = scmp.ne.s32.totalorder %s155, %s169
    %p171 = scmp.eq.s32.totalorder %s19, 0
    %p172 = por %p170, %p171
    %s173 = ssub.s32 %s13, %s20
    %p174 = scmp.eq.s32.totalorder %s173, 0
    %s176 = sadd.s32 %s175, 1
    %s177 = scalar_select %p174, %s175, %s176
    %p180 = pneg %p174
    %p181 = scmp.eq.s32.totalorder %s13, 1
    %p182 = por %p180, %p181
    %p183 = scmp.ne.s32.totalorder %s175, %s178
    %p184 = scmp.eq.s32.totalorder %s13, 0
    %p185 = por %p183, %p184
    %p186 = scmp.ne.s32.totalorder %s175, %s178
    %p187 = scmp.eq.s32.totalorder %s18, 1
    %p188 = por %p186, %p187
    %p189 = scmp.ne.s32.totalorder %s178, %s179
    %p190 = scmp.eq.s32.totalorder %s18, 0
    %p191 = por %p189, %p190
    %p192 = scmp.ne.s32.totalorder %s178, %s179
    %p193 = scmp.eq.s32.totalorder %s19, 1
    %p194 = por %p192, %p193
    %p196 = scmp.ne.s32.totalorder %s179, %s195
    %p197 = scmp.eq.s32.totalorder %s19, 0
    %p198 = por %p196, %p197
    %p199 = scmp.le.s32.totalorder 1, %s13
    %p200 = scmp.lt.s32.totalorder %s13, 3
    %p201 = pnand %p199, %p200
    %p202 = pneg %p201
    // Predicated region
    $region9: #{mlp_forward.1} parent=5 // pred_check
      _
    $region10: #{mlp_forward.1} parent=5 // pred_check_branch
      %204 = sbr.rel (%p201) target = $region12
    $region11: #{mlp_forward.1} parent=5 // pred_region
      %s205 = ssub.s32 %s13, 1
      // Predicated region
      $region13: #{mlp_forward.1} parent=11 // pred_check
        %p206 = pneg %p60
      $region14: #{mlp_forward.1} parent=11 // pred_check_branch
        %208 = sbr.rel (%p206) target = $region16
      $region15: #{mlp_forward.1} parent=11 // pred_region
        _
      $region16: #{mlp_forward.1} parent=11 // pred_fallthru
        _
      // Predicated region
      $region17: #{mlp_forward.1} parent=11 // pred_check
        %p209 = pneg %p81
      $region18: #{mlp_forward.1} parent=11 // pred_check_branch
        %211 = sbr.rel (%p209) target = $region20
      $region19: #{mlp_forward.1} parent=11 // pred_region
        _
      $region20: #{mlp_forward.1} parent=11 // pred_fallthru
        _
      // Predicated region
      $region21: #{mlp_forward.1} parent=11 // pred_check
        %p212 = pneg %p102
      $region22: #{mlp_forward.1} parent=11 // pred_check_branch
        %214 = sbr.rel (%p212) target = $region24
      $region23: #{mlp_forward.1} parent=11 // pred_region
        _
      $region24: #{mlp_forward.1} parent=11 // pred_fallthru
        _
      // Predicated region
      $region25: #{mlp_forward.1} parent=11 // pred_check
        %p215 = pneg %p123
      $region26: #{mlp_forward.1} parent=11 // pred_check_branch
        %217 = sbr.rel (%p215) target = $region28
      $region27: #{mlp_forward.1} parent=11 // pred_region
        _
      $region28: #{mlp_forward.1} parent=11 // pred_fallthru
        _
      // Predicated region
      $region29: #{mlp_forward.1} parent=11 // pred_check
        %p218 = pneg %p144
      $region30: #{mlp_forward.1} parent=11 // pred_check_branch
        %220 = sbr.rel (%p218) target = $region32
      $region31: #{mlp_forward.1} parent=11 // pred_region
        _
      $region32: #{mlp_forward.1} parent=11 // pred_fallthru
        _
      // Predicated region
      $region33: #{mlp_forward.1} parent=11 // pred_check
        %p221 = pneg %p165
      $region34: #{mlp_forward.1} parent=11 // pred_check_branch
        %223 = sbr.rel (%p221) target = $region36
      $region35: #{mlp_forward.1} parent=11 // pred_region
        _
      $region36: #{mlp_forward.1} parent=11 // pred_fallthru
        _
    $region12: #{mlp_forward.1} parent=5 // pred_fallthru
      _
    %p224 = scmp.lt.s32.totalorder %s13, 2
    // Predicated region
    $region37: #{mlp_forward.1} parent=5 // pred_check
      %p225 = pneg %p224
    $region38: #{mlp_forward.1} parent=5 // pred_check_branch
      %227 = sbr.rel (%p225) target = $region40
    $region39: #{mlp_forward.1} parent=5 // pred_region
      // Predicated region
      $region41: #{mlp_forward.1} parent=39 // pred_check
        %p228 = pneg %p33
      $region42: #{mlp_forward.1} parent=39 // pred_check_branch
        %230 = sbr.rel (%p228) target = $region44
      $region43: #{mlp_forward.1} parent=39 // pred_region
        %s231 = smul.u32 16, %s13
        %p232 = scmp.lt.s32.totalorder %s231, 31
        %s233 = scalar_select %p232, %s231, 31
        %s234 = smul.addr %s233, 4
        %s235 = scalar_lea.vmem %s0, %s234
        %s236 = smul.u32 16, %s13
      $region44: #{mlp_forward.1} parent=39 // pred_fallthru
        _
    $region40: #{mlp_forward.1} parent=5 // pred_fallthru
      _
    %p237 = scmp.le.s32.totalorder 1, %s13
    %p238 = scmp.lt.s32.totalorder %s13, 3
    %p239 = pnand %p237, %p238
    %p240 = pneg %p239
    // Predicated region
    $region45: #{mlp_forward.1} parent=5 // pred_check
      _
    $region46: #{mlp_forward.1} parent=5 // pred_check_branch
      %242 = sbr.rel (%p239) target = $region48
    $region47: #{mlp_forward.1} parent=5 // pred_region
      %s243 = ssub.s32 %s13, 1
      %s244 = smul.u32 16, %s18
      %p245 = scmp.lt.s32.totalorder %s244, 31
      %s246 = scalar_select %p245, %s244, 31
      %s247 = smul.addr %s246, 4
      %s248 = scalar_lea.vmem %s0, %s247
      %p249 = pneg %p39
      %p250 = pneg %p36
      %p251 = pneg %p60
      %p252 = pneg %p57
      %p253 = pneg %p81
      %p254 = pneg %p78
      %p255 = pneg %p102
      %p256 = pneg %p99
      %p257 = pneg %p123
      %p258 = pneg %p120
      %p259 = pneg %p144
      %p260 = pneg %p141
      %p261 = pneg %p165
      %p262 = pneg %p162
      %p263 = pneg %p191
      %p264 = pneg %p188
      %s265 = smul.u32 16, %s18
      %p266 = scmp.lt.s32.totalorder %s265, 31
      %s267 = scalar_select %p266, %s265, 31
      %s268 = smul.addr %s267, 8
      %s269 = scalar_lea.vmem %s7, %s268
      %s270 = smul.u32 16, %s18
      %p271 = scmp.lt.s32.totalorder %s270, 31
      %s272 = scalar_select %p271, %s270, 31
      %s273 = smul.addr %s272, 4
      %s274 = scalar_lea.vmem %s0, %s273
      %s275 = smul.u32 16, %s18
      %s276 = smul.u32 16, %s18
      %p277 = scmp.lt.s32.totalorder %s276, 31
      %s278 = scalar_select %p277, %s276, 31
      %s279 = smul.addr %s278, 8
      %s280 = scalar_lea.vmem %s7, %s279
      %s281 = smul.u32 16, %s18
      %v283 = vld [vmem:[%s274] sm:$0xf]
      %v284 = vld [vmem:[%s274 + $0x4] sm:$0xf]
      %v285 = vld [vmem:[%s274 + $0x8] sm:$0xf]
      %v286 = vld [vmem:[%s274 + $0xc] sm:$0xf]
      %v287 = vld [vmem:[%s274 + $0x10] sm:$0xf]
      %v288 = vld [vmem:[%s274 + $0x14] sm:$0xf]
      %v289 = vld [vmem:[%s274 + $0x18] sm:$0xf]
      %v290 = vld [vmem:[%s274 + $0x1c] sm:$0xf]
      %v291 = vld [vmem:[%s274 + $0x20] sm:$0xf]
      %v292 = vld [vmem:[%s274 + $0x24] sm:$0xf]
      %v293 = vld [vmem:[%s274 + $0x28] sm:$0xf]
      %v294 = vld [vmem:[%s274 + $0x2c] sm:$0xf]
      %v295 = vld [vmem:[%s274 + $0x30] sm:$0xf]
      %v296 = vld [vmem:[%s274 + $0x34] sm:$0xf]
      %v297 = vld [vmem:[%s274 + $0x38] sm:$0xf]
      %v298 = vld [vmem:[%s274 + $0x3c] sm:$0xf]
      %v299 = vld [vmem:[%s1] sm:$0xf]
      %v300 = vld [vmem:[%s1 + $0x4] sm:$0xf]
      %v301 = vld [vmem:[%s2] sm:$0x1]
      %v303 = vlaneseq
      %v304 = vshrl.u32 %v303, 7
      %v305 = vsub.s32 0, %v304
      %v306 = vrot.slane %v301, %v305
      %v324 = vunpack.c.l.b16 %v283
      %v325 = vunpack.c.l.b16 %v284
      %v326 = vunpack.c.l.b16 %v285
      %v327 = vunpack.c.l.b16 %v286
      %v328 = vunpack.c.l.b16 %v287
      %v329 = vunpack.c.l.b16 %v288
      %v330 = vunpack.c.l.b16 %v289
      %v331 = vunpack.c.l.b16 %v290
      %v332 = vunpack.c.l.b16 %v291
      %v333 = vunpack.c.l.b16 %v292
      %v334 = vunpack.c.l.b16 %v293
      %v335 = vunpack.c.l.b16 %v294
      %v336 = vunpack.c.l.b16 %v295
      %v337 = vunpack.c.l.b16 %v296
      %v338 = vunpack.c.l.b16 %v297
      %v339 = vunpack.c.l.b16 %v298
      %v340 = vpack.c.b16 %v325, %v324
      %v341 = vpack.c.b16 %v327, %v326
      %v342 = vpack.c.b16 %v329, %v328
      %v343 = vpack.c.b16 %v331, %v330
      %v344 = vpack.c.b16 %v333, %v332
      %v345 = vpack.c.b16 %v335, %v334
      %v346 = vpack.c.b16 %v337, %v336
      %v347 = vpack.c.b16 %v339, %v338
      %v350 = vunpack.c.l.b16 %v299
      %v351 = vunpack.c.l.b16 %v300
      %v352 = vpack.c.b16 %v351, %v350
      %vm354 = vcmask 130048
      %v356 = vsel %vm354, %v340, 0
      %v359 = vsel %vm354, %v341, 0
      %v362 = vsel %vm354, %v342, 0
      %v365 = vsel %vm354, %v343, 0
      %v368 = vsel %vm354, %v344, 0
      %v371 = vsel %vm354, %v345, 0
      %v374 = vsel %vm354, %v346, 0
      %v377 = vsel %vm354, %v347, 0
      %379 = vmatprep.subr.bf16.mxu0 0
      %380 = vmatpush1.bf16.msra.mxu0 %v352
      %381 = vmatprep.subr.bf16.mxu0 0
      %382 = vmatpush1.bf16.msra.mxu0 0
      %383 = vmatprep.subr.bf16.mxu0 0
      %384 = vmatpush1.bf16.msra.mxu0 0
      %385 = vmatprep.subr.bf16.mxu0 0
      %386 = vmatpush1.bf16.msra.mxu0 0
      %387 = vmatprep.subr.bf16.mxu0 0
      %388 = vmatpush1.bf16.msra.mxu0 0
      %389 = vmatprep.subr.bf16.mxu0 0
      %390 = vmatpush1.bf16.msra.mxu0 0
      %391 = vmatprep.subr.bf16.mxu0 0
      %392 = vmatpush1.bf16.msra.mxu0 0
      %393 = vmatprep.subr.bf16.mxu0 0
      %394 = vmatpush1.bf16.msra.mxu0 0
      %395 = vmatprep.subr.bf16.mxu0 0
      %396 = vmatpush1.bf16.msra.mxu0 0
      %397 = vmatprep.subr.bf16.mxu0 0
      %398 = vmatpush1.bf16.msra.mxu0 0
      %399 = vmatprep.subr.bf16.mxu0 0
      %400 = vmatpush1.bf16.msra.mxu0 0
      %401 = vmatprep.subr.bf16.mxu0 0
      %402 = vmatpush1.bf16.msra.mxu0 0
      %403 = vmatprep.subr.bf16.mxu0 0
      %404 = vmatpush1.bf16.msra.mxu0 0
      %405 = vmatprep.subr.bf16.mxu0 0
      %406 = vmatpush1.bf16.msra.mxu0 0
      %407 = vmatprep.subr.bf16.mxu0 0
      %408 = vmatpush1.bf16.msra.mxu0 0
      %409 = vmatprep.subr.bf16.mxu0 0
      %410 = vmatpush1.bf16.msra.mxu0 0
      %411 = vmatprep.mubr.bf16.mxu0 0
      %412 = vmatmul.mubr.bf16.gmra.mrb[0].mxu0 %v356
      %v413 = vpop.f32.mrb[0].mxu0
      %v414 = vadd.f32 %v306, %v413
      %v415 = vpop.f32.mrb[0].mxu0
      %v416 = vpop.f32.mrb[0].mxu0
      %v417 = vadd.f32 %v306, %v416
      %v418 = vpop.f32.mrb[0].mxu0
      %419 = vmatprep.mubr.bf16.mxu0 0
      %420 = vmatmul.mubr.bf16.gmra.mrb[0].mxu0 %v359
      %v421 = vpop.f32.mrb[0].mxu0
      %v422 = vadd.f32 %v306, %v421
      %v423 = vpop.f32.mrb[0].mxu0
      %v424 = vpop.f32.mrb[0].mxu0
      %v425 = vadd.f32 %v306, %v424
      %v426 = vpop.f32.mrb[0].mxu0
      %427 = vmatprep.mubr.bf16.mxu0 0
      %428 = vmatmul.mubr.bf16.gmra.mrb[0].mxu0 %v362
      %v429 = vpop.f32.mrb[0].mxu0
      %v430 = vadd.f32 %v306, %v429
      %v431 = vpop.f32.mrb[0].mxu0
      %v432 = vpop.f32.mrb[0].mxu0
      %v433 = vadd.f32 %v306, %v432
      %v434 = vpop.f32.mrb[0].mxu0
      %435 = vmatprep.mubr.bf16.mxu0 0
      %436 = vmatmul.mubr.bf16.gmra.mrb[0].mxu0 %v365
      %v437 = vpop.f32.mrb[0].mxu0
      %v438 = vadd.f32 %v306, %v437
      %v439 = vpop.f32.mrb[0].mxu0
      %v440 = vpop.f32.mrb[0].mxu0
      %v441 = vadd.f32 %v306, %v440
      %v442 = vpop.f32.mrb[0].mxu0
      %443 = vmatprep.mubr.bf16.mxu0 0
      %444 = vmatmul.mubr.bf16.gmra.mrb[0].mxu0 %v368
      %v445 = vpop.f32.mrb[0].mxu0
      %v446 = vadd.f32 %v306, %v445
      %v447 = vpop.f32.mrb[0].mxu0
      %v448 = vpop.f32.mrb[0].mxu0
      %v449 = vadd.f32 %v306, %v448
      %v450 = vpop.f32.mrb[0].mxu0
      %451 = vmatprep.mubr.bf16.mxu0 0
      %452 = vmatmul.mubr.bf16.gmra.mrb[0].mxu0 %v371
      %v453 = vpop.f32.mrb[0].mxu0
      %v454 = vadd.f32 %v306, %v453
      %v455 = vpop.f32.mrb[0].mxu0
      %v456 = vpop.f32.mrb[0].mxu0
      %v457 = vadd.f32 %v306, %v456
      %v458 = vpop.f32.mrb[0].mxu0
      %459 = vmatprep.mubr.bf16.mxu0 0
      %460 = vmatmul.mubr.bf16.gmra.mrb[0].mxu0 %v374
      %v461 = vpop.f32.mrb[0].mxu0
      %v462 = vadd.f32 %v306, %v461
      %v463 = vpop.f32.mrb[0].mxu0
      %v464 = vpop.f32.mrb[0].mxu0
      %v465 = vadd.f32 %v306, %v464
      %v466 = vpop.f32.mrb[0].mxu0
      %467 = vmatprep.mubr.bf16.mxu0 0
      %468 = vmatmul.mubr.bf16.gmra.mrb[0].mxu0 %v377
      %v469 = vpop.f32.mrb[0].mxu0
      %v470 = vadd.f32 %v306, %v469
      %v471 = vpop.f32.mrb[0].mxu0
      %v472 = vpop.f32.mrb[0].mxu0
      %v473 = vadd.f32 %v306, %v472
      %v474 = vpop.f32.mrb[0].mxu0
      %475 = vdwg.mxu0
      %v476 = vmax.f32 %v414, 0.0
      %v477 = vmax.f32 %v417, 0.0
      %v478 = vmax.f32 %v422, 0.0
      %v479 = vmax.f32 %v425, 0.0
      %v480 = vmax.f32 %v430, 0.0
      %v481 = vmax.f32 %v433, 0.0
      %v482 = vmax.f32 %v438, 0.0
      %v483 = vmax.f32 %v441, 0.0
      %v484 = vmax.f32 %v446, 0.0
      %v485 = vmax.f32 %v449, 0.0
      %v486 = vmax.f32 %v454, 0.0
      %v487 = vmax.f32 %v457, 0.0
      %v488 = vmax.f32 %v462, 0.0
      %v489 = vmax.f32 %v465, 0.0
      %v490 = vmax.f32 %v470, 0.0
      %v491 = vmax.f32 %v473, 0.0
      %v492 = vld [vmem:[%s3] sm:$0xf]
      %v493 = vld [vmem:[%s3 + $0x4] sm:$0xf]
      %v494 = vld [vmem:[%s3 + $0x8] sm:$0xf]
      %v495 = vld [vmem:[%s3 + $0xc] sm:$0xf]
      %v496 = vld [vmem:[%s3 + $0x10] sm:$0xf]
      %v497 = vld [vmem:[%s3 + $0x14] sm:$0xf]
      %v498 = vld [vmem:[%s3 + $0x18] sm:$0xf]
      %v499 = vld [vmem:[%s3 + $0x1c] sm:$0xf]
      %v500 = vld [vmem:[%s3 + $0x20] sm:$0xf]
      %v501 = vld [vmem:[%s3 + $0x24] sm:$0xf]
      %v502 = vld [vmem:[%s3 + $0x28] sm:$0xf]
      %v503 = vld [vmem:[%s3 + $0x2c] sm:$0xf]
      %v504 = vld [vmem:[%s3 + $0x30] sm:$0xf]
      %v505 = vld [vmem:[%s3 + $0x34] sm:$0xf]
      %v506 = vld [vmem:[%s3 + $0x38] sm:$0xf]
      %v507 = vld [vmem:[%s3 + $0x3c] sm:$0xf]
      %v508 = vld [vmem:[%s4] sm:$0x1]
      %v509 = vpack.c.bf16 %v477, %v476
      %v510 = vpack.c.bf16 %v479, %v478
      %v511 = vpack.c.bf16 %v481, %v480
      %v512 = vpack.c.bf16 %v483, %v482
      %v513 = vpack.c.bf16 %v485, %v484
      %v514 = vpack.c.bf16 %v487, %v486
      %v515 = vpack.c.bf16 %v489, %v488
      %v516 = vpack.c.bf16 %v491, %v490
      %v518 = vlaneseq
      %v519 = vshrl.u32 %v518, 7
      %v520 = vsub.s32 0, %v519
      %v521 = vrot.slane %v508, %v520
      %v539 = vunpack.c.l.b16 %v492
      %v540 = vunpack.c.l.b16 %v493
      %v541 = vunpack.c.l.b16 %v494
      %v542 = vunpack.c.l.b16 %v495
      %v543 = vunpack.c.l.b16 %v496
      %v544 = vunpack.c.l.b16 %v497
      %v545 = vunpack.c.l.b16 %v498
      %v546 = vunpack.c.l.b16 %v499
      %v547 = vunpack.c.l.b16 %v500
      %v548 = vunpack.c.l.b16 %v501
      %v549 = vunpack.c.l.b16 %v502
      %v550 = vunpack.c.l.b16 %v503
      %v551 = vunpack.c.l.b16 %v504
      %v552 = vunpack.c.l.b16 %v505
      %v553 = vunpack.c.l.b16 %v506
      %v554 = vunpack.c.l.b16 %v507
      %v555 = vpack.c.b16 %v540, %v539
      %v556 = vpack.c.b16 %v542, %v541
      %v557 = vpack.c.b16 %v544, %v543
      %v558 = vpack.c.b16 %v546, %v545
      %v559 = vpack.c.b16 %v548, %v547
      %v560 = vpack.c.b16 %v550, %v549
      %v561 = vpack.c.b16 %v552, %v551
      %v562 = vpack.c.b16 %v554, %v553
      %571 = vmatprep.subr.bf16.mxu0 0
      %572 = vmatpush1.bf16.msra.mxu0 %v555
      %573 = vmatprep.subr.bf16.mxu0 0
      %574 = vmatpush1.bf16.msra.mxu0 %v556
      %575 = vmatprep.subr.bf16.mxu0 0
      %576 = vmatpush1.bf16.msra.mxu0 %v557
      %577 = vmatprep.subr.bf16.mxu0 0
      %578 = vmatpush1.bf16.msra.mxu0 %v558
      %579 = vmatprep.subr.bf16.mxu0 0
      %580 = vmatpush1.bf16.msra.mxu0 %v559
      %581 = vmatprep.subr.bf16.mxu0 0
      %582 = vmatpush1.bf16.msra.mxu0 %v560
      %583 = vmatprep.subr.bf16.mxu0 0
      %584 = vmatpush1.bf16.msra.mxu0 %v561
      %585 = vmatprep.subr.bf16.mxu0 0
      %586 = vmatpush1.bf16.msra.mxu0 %v562
      %587 = vmatprep.subr.bf16.mxu0 0
      %588 = vmatpush1.bf16.msra.mxu0 0
      %589 = vmatprep.subr.bf16.mxu0 0
      %590 = vmatpush1.bf16.msra.mxu0 0
      %591 = vmatprep.subr.bf16.mxu0 0
      %592 = vmatpush1.bf16.msra.mxu0 0
      %593 = vmatprep.subr.bf16.mxu0 0
      %594 = vmatpush1.bf16.msra.mxu0 0
      %595 = vmatprep.subr.bf16.mxu0 0
      %596 = vmatpush1.bf16.msra.mxu0 0
      %597 = vmatprep.subr.bf16.mxu0 0
      %598 = vmatpush1.bf16.msra.mxu0 0
      %599 = vmatprep.subr.bf16.mxu0 0
      %600 = vmatpush1.bf16.msra.mxu0 0
      %601 = vmatprep.subr.bf16.mxu0 0
      %602 = vmatpush1.bf16.msra.mxu0 0
      %603 = vmatprep.mubr.bf16.mxu0 0
      %604 = vmatmul.mubr.bf16.gmra.mrb[0].mxu0 %v509
      %v605 = vpop.f32.mrb[0].mxu0
      %v606 = vadd.f32 %v521, %v605
      %v607 = vpop.f32.mrb[0].mxu0
      %v608 = vpop.f32.mrb[0].mxu0
      %v609 = vadd.f32 %v521, %v608
      %v610 = vpop.f32.mrb[0].mxu0
      %611 = vmatprep.mubr.bf16.mxu0 0
      %612 = vmatmul.mubr.bf16.gmra.mrb[0].mxu0 %v510
      %v613 = vpop.f32.mrb[0].mxu0
      %v614 = vadd.f32 %v521, %v613
      %v615 = vpop.f32.mrb[0].mxu0
      %v616 = vpop.f32.mrb[0].mxu0
      %v617 = vadd.f32 %v521, %v616
      %v618 = vpop.f32.mrb[0].mxu0
      %619 = vmatprep.mubr.bf16.mxu0 0
      %620 = vmatmul.mubr.bf16.gmra.mrb[0].mxu0 %v511
      %v621 = vpop.f32.mrb[0].mxu0
      %v622 = vadd.f32 %v521, %v621
      %v623 = vpop.f32.mrb[0].mxu0
      %v624 = vpop.f32.mrb[0].mxu0
      %v625 = vadd.f32 %v521, %v624
      %v626 = vpop.f32.mrb[0].mxu0
      %627 = vmatprep.mubr.bf16.mxu0 0
      %628 = vmatmul.mubr.bf16.gmra.mrb[0].mxu0 %v512
      %v629 = vpop.f32.mrb[0].mxu0
      %v630 = vadd.f32 %v521, %v629
      %v631 = vpop.f32.mrb[0].mxu0
      %v632 = vpop.f32.mrb[0].mxu0
      %v633 = vadd.f32 %v521, %v632
      %v634 = vpop.f32.mrb[0].mxu0
      %635 = vmatprep.mubr.bf16.mxu0 0
      %636 = vmatmul.mubr.bf16.gmra.mrb[0].mxu0 %v513
      %v637 = vpop.f32.mrb[0].mxu0
      %v638 = vadd.f32 %v521, %v637
      %v639 = vpop.f32.mrb[0].mxu0
      %v640 = vpop.f32.mrb[0].mxu0
      %v641 = vadd.f32 %v521, %v640
      %v642 = vpop.f32.mrb[0].mxu0
      %643 = vmatprep.mubr.bf16.mxu0 0
      %644 = vmatmul.mubr.bf16.gmra.mrb[0].mxu0 %v514
      %v645 = vpop.f32.mrb[0].mxu0
      %v646 = vadd.f32 %v521, %v645
      %v647 = vpop.f32.mrb[0].mxu0
      %v648 = vpop.f32.mrb[0].mxu0
      %v649 = vadd.f32 %v521, %v648
      %v650 = vpop.f32.mrb[0].mxu0
      %651 = vmatprep.mubr.bf16.mxu0 0
      %652 = vmatmul.mubr.bf16.gmra.mrb[0].mxu0 %v515
      %v653 = vpop.f32.mrb[0].mxu0
      %v654 = vadd.f32 %v521, %v653
      %v655 = vpop.f32.mrb[0].mxu0
      %v656 = vpop.f32.mrb[0].mxu0
      %v657 = vadd.f32 %v521, %v656
      %v658 = vpop.f32.mrb[0].mxu0
      %659 = vmatprep.mubr.bf16.mxu0 0
      %660 = vmatmul.mubr.bf16.gmra.mrb[0].mxu0 %v516
      %v661 = vpop.f32.mrb[0].mxu0
      %v662 = vadd.f32 %v521, %v661
      %v663 = vpop.f32.mrb[0].mxu0
      %v664 = vpop.f32.mrb[0].mxu0
      %v665 = vadd.f32 %v521, %v664
      %v666 = vpop.f32.mrb[0].mxu0
      %667 = vdwg.mxu0
      %v668 = vmax.f32 %v606, 0.0
      %v669 = vmax.f32 %v609, 0.0
      %v670 = vmax.f32 %v614, 0.0
      %v671 = vmax.f32 %v617, 0.0
      %v672 = vmax.f32 %v622, 0.0
      %v673 = vmax.f32 %v625, 0.0
      %v674 = vmax.f32 %v630, 0.0
      %v675 = vmax.f32 %v633, 0.0
      %v676 = vmax.f32 %v638, 0.0
      %v677 = vmax.f32 %v641, 0.0
      %v678 = vmax.f32 %v646, 0.0
      %v679 = vmax.f32 %v649, 0.0
      %v680 = vmax.f32 %v654, 0.0
      %v681 = vmax.f32 %v657, 0.0
      %v682 = vmax.f32 %v662, 0.0
      %v683 = vmax.f32 %v665, 0.0
      %v684 = vld [vmem:[%s5] sm:$0xf]
      %v685 = vld [vmem:[%s5 + $0x4] sm:$0xf]
      %v686 = vld [vmem:[%s5 + $0x8] sm:$0xf]
      %v687 = vld [vmem:[%s5 + $0xc] sm:$0xf]
      %v688 = vld [vmem:[%s5 + $0x10] sm:$0xf]
      %v689 = vld [vmem:[%s5 + $0x14] sm:$0xf]
      %v690 = vld [vmem:[%s5 + $0x18] sm:$0xf]
      %v691 = vld [vmem:[%s5 + $0x1c] sm:$0xf]
      %v692 = vld [vmem:[%s5 + $0x20] sm:$0xf]
      %v693 = vld [vmem:[%s5 + $0x24] sm:$0xf]
      %v694 = vld [vmem:[%s5 + $0x28] sm:$0xf]
      %v695 = vld [vmem:[%s5 + $0x2c] sm:$0xf]
      %v696 = vld [vmem:[%s5 + $0x30] sm:$0xf]
      %v697 = vld [vmem:[%s5 + $0x34] sm:$0xf]
      %v698 = vld [vmem:[%s5 + $0x38] sm:$0xf]
      %v699 = vld [vmem:[%s5 + $0x3c] sm:$0xf]
      %v700 = vld [vmem:[%s6] sm:$0x1]
      %v701 = vpack.c.bf16 %v669, %v668
      %v702 = vpack.c.bf16 %v671, %v670
      %v703 = vpack.c.bf16 %v673, %v672
      %v704 = vpack.c.bf16 %v675, %v674
      %v705 = vpack.c.bf16 %v677, %v676
      %v706 = vpack.c.bf16 %v679, %v678
      %v707 = vpack.c.bf16 %v681, %v680
      %v708 = vpack.c.bf16 %v683, %v682
      %v710 = vlaneseq
      %v711 = vshrl.u32 %v710, 7
      %v712 = vsub.s32 0, %v711
      %v713 = vrot.slane %v700, %v712
      %v731 = vunpack.c.l.b16 %v684
      %v732 = vunpack.c.l.b16 %v685
      %v733 = vunpack.c.l.b16 %v686
      %v734 = vunpack.c.l.b16 %v687
      %v735 = vunpack.c.l.b16 %v688
      %v736 = vunpack.c.l.b16 %v689
      %v737 = vunpack.c.l.b16 %v690
      %v738 = vunpack.c.l.b16 %v691
      %v739 = vunpack.c.l.b16 %v692
      %v740 = vunpack.c.l.b16 %v693
      %v741 = vunpack.c.l.b16 %v694
      %v742 = vunpack.c.l.b16 %v695
      %v743 = vunpack.c.l.b16 %v696
      %v744 = vunpack.c.l.b16 %v697
      %v745 = vunpack.c.l.b16 %v698
      %v746 = vunpack.c.l.b16 %v699
      %v747 = vpack.c.b16 %v732, %v731
      %v748 = vpack.c.b16 %v734, %v733
      %v749 = vpack.c.b16 %v736, %v735
      %v750 = vpack.c.b16 %v738, %v737
      %v751 = vpack.c.b16 %v740, %v739
      %v752 = vpack.c.b16 %v742, %v741
      %v753 = vpack.c.b16 %v744, %v743
      %v754 = vpack.c.b16 %v746, %v745
      %763 = vmatprep.subr.bf16.mxu0 0
      %764 = vmatpush1.bf16.msra.mxu0 %v747
      %765 = vmatprep.subr.bf16.mxu0 0
      %766 = vmatpush1.bf16.msra.mxu0 %v748
      %767 = vmatprep.subr.bf16.mxu0 0
      %768 = vmatpush1.bf16.msra.mxu0 %v749
      %769 = vmatprep.subr.bf16.mxu0 0
      %770 = vmatpush1.bf16.msra.mxu0 %v750
      %771 = vmatprep.subr.bf16.mxu0 0
      %772 = vmatpush1.bf16.msra.mxu0 %v751
      %773 = vmatprep.subr.bf16.mxu0 0
      %774 = vmatpush1.bf16.msra.mxu0 %v752
      %775 = vmatprep.subr.bf16.mxu0 0
      %776 = vmatpush1.bf16.msra.mxu0 %v753
      %777 = vmatprep.subr.bf16.mxu0 0
      %778 = vmatpush1.bf16.msra.mxu0 %v754
      %779 = vmatprep.subr.bf16.mxu0 0
      %780 = vmatpush1.bf16.msra.mxu0 0
      %781 = vmatprep.subr.bf16.mxu0 0
      %782 = vmatpush1.bf16.msra.mxu0 0
      %783 = vmatprep.subr.bf16.mxu0 0
      %784 = vmatpush1.bf16.msra.mxu0 0
      %785 = vmatprep.subr.bf16.mxu0 0
      %786 = vmatpush1.bf16.msra.mxu0 0
      %787 = vmatprep.subr.bf16.mxu0 0
      %788 = vmatpush1.bf16.msra.mxu0 0
      %789 = vmatprep.subr.bf16.mxu0 0
      %790 = vmatpush1.bf16.msra.mxu0 0
      %791 = vmatprep.subr.bf16.mxu0 0
      %792 = vmatpush1.bf16.msra.mxu0 0
      %793 = vmatprep.subr.bf16.mxu0 0
      %794 = vmatpush1.bf16.msra.mxu0 0
      %795 = vmatprep.mubr.bf16.mxu0 0
      %796 = vmatmul.mubr.bf16.gmra.mrb[0].mxu0 %v701
      %v797 = vpop.f32.mrb[0].mxu0
      %v798 = vadd.f32 %v713, %v797
      %v799 = vpop.f32.mrb[0].mxu0
      %v800 = vpop.f32.mrb[0].mxu0
      %v801 = vadd.f32 %v713, %v800
      %v802 = vpop.f32.mrb[0].mxu0
      %803 = vmatprep.mubr.bf16.mxu0 0
      %804 = vmatmul.mubr.bf16.gmra.mrb[0].mxu0 %v702
      %v805 = vpop.f32.mrb[0].mxu0
      %v806 = vadd.f32 %v713, %v805
      %v807 = vpop.f32.mrb[0].mxu0
      %v808 = vpop.f32.mrb[0].mxu0
      %v809 = vadd.f32 %v713, %v808
      %v810 = vpop.f32.mrb[0].mxu0
      %811 = vmatprep.mubr.bf16.mxu0 0
      %812 = vmatmul.mubr.bf16.gmra.mrb[0].mxu0 %v703
      %v813 = vpop.f32.mrb[0].mxu0
      %v814 = vadd.f32 %v713, %v813
      %v815 = vpop.f32.mrb[0].mxu0
      %v816 = vpop.f32.mrb[0].mxu0
      %v817 = vadd.f32 %v713, %v816
      %v818 = vpop.f32.mrb[0].mxu0
      %819 = vmatprep.mubr.bf16.mxu0 0
      %820 = vmatmul.mubr.bf16.gmra.mrb[0].mxu0 %v704
      %v821 = vpop.f32.mrb[0].mxu0
      %v822 = vadd.f32 %v713, %v821
      %v823 = vpop.f32.mrb[0].mxu0
      %v824 = vpop.f32.mrb[0].mxu0
      %v825 = vadd.f32 %v713, %v824
      %v826 = vpop.f32.mrb[0].mxu0
      %827 = vmatprep.mubr.bf16.mxu0 0
      %828 = vmatmul.mubr.bf16.gmra.mrb[0].mxu0 %v705
      %v829 = vpop.f32.mrb[0].mxu0
      %v830 = vadd.f32 %v713, %v829
      %v831 = vpop.f32.mrb[0].mxu0
      %v832 = vpop.f32.mrb[0].mxu0
      %v833 = vadd.f32 %v713, %v832
      %v834 = vpop.f32.mrb[0].mxu0
      %835 = vmatprep.mubr.bf16.mxu0 0
      %836 = vmatmul.mubr.bf16.gmra.mrb[0].mxu0 %v706
      %v837 = vpop.f32.mrb[0].mxu0
      %v838 = vadd.f32 %v713, %v837
      %v839 = vpop.f32.mrb[0].mxu0
      %v840 = vpop.f32.mrb[0].mxu0
      %v841 = vadd.f32 %v713, %v840
      %v842 = vpop.f32.mrb[0].mxu0
      %843 = vmatprep.mubr.bf16.mxu0 0
      %844 = vmatmul.mubr.bf16.gmra.mrb[0].mxu0 %v707
      %v845 = vpop.f32.mrb[0].mxu0
      %v846 = vadd.f32 %v713, %v845
      %v847 = vpop.f32.mrb[0].mxu0
      %v848 = vpop.f32.mrb[0].mxu0
      %v849 = vadd.f32 %v713, %v848
      %v850 = vpop.f32.mrb[0].mxu0
      %851 = vmatprep.mubr.bf16.mxu0 0
      %852 = vmatmul.mubr.bf16.gmra.mrb[0].mxu0 %v708
      %v853 = vpop.f32.mrb[0].mxu0
      %v854 = vadd.f32 %v713, %v853
      %v855 = vpop.f32.mrb[0].mxu0
      %v856 = vpop.f32.mrb[0].mxu0
      %v857 = vadd.f32 %v713, %v856
      %v858 = vpop.f32.mrb[0].mxu0
      %859 = vdwg.mxu0
      %860 = vmax.xlane.f32.xlu0 %v798
      %v861 = vpop.xlane.xlu0 %860
      %862 = vmax.xlane.f32.xlu0 %v801
      %v863 = vpop.xlane.xlu0 %862
      %864 = vmax.xlane.f32.xlu0 %v806
      %v865 = vpop.xlane.xlu0 %864
      %866 = vmax.xlane.f32.xlu0 %v809
      %v867 = vpop.xlane.xlu0 %866
      %868 = vmax.xlane.f32.xlu0 %v814
      %v869 = vpop.xlane.xlu0 %868
      %870 = vmax.xlane.f32.xlu0 %v817
      %v871 = vpop.xlane.xlu0 %870
      %872 = vmax.xlane.f32.xlu0 %v822
      %v873 = vpop.xlane.xlu0 %872
      %874 = vmax.xlane.f32.xlu0 %v825
      %v875 = vpop.xlane.xlu0 %874
      %876 = vmax.xlane.f32.xlu0 %v830
      %v877 = vpop.xlane.xlu0 %876
      %878 = vmax.xlane.f32.xlu0 %v833
      %v879 = vpop.xlane.xlu0 %878
      %880 = vmax.xlane.f32.xlu0 %v838
      %v881 = vpop.xlane.xlu0 %880
      %882 = vmax.xlane.f32.xlu0 %v841
      %v883 = vpop.xlane.xlu0 %882
      %884 = vmax.xlane.f32.xlu0 %v846
      %v885 = vpop.xlane.xlu0 %884
      %886 = vmax.xlane.f32.xlu0 %v849
      %v887 = vpop.xlane.xlu0 %886
      %888 = vmax.xlane.f32.xlu0 %v854
      %v889 = vpop.xlane.xlu0 %888
      %890 = vmax.xlane.f32.xlu0 %v857
      %v891 = vpop.xlane.xlu0 %890
      %v892 = vsub.f32 %v798, %v861
      %v893 = vsub.f32 %v801, %v863
      %v894 = vsub.f32 %v806, %v865
      %v895 = vsub.f32 %v809, %v867
      %v896 = vsub.f32 %v814, %v869
      %v897 = vsub.f32 %v817, %v871
      %v898 = vsub.f32 %v822, %v873
      %v899 = vsub.f32 %v825, %v875
      %v900 = vsub.f32 %v830, %v877
      %v901 = vsub.f32 %v833, %v879
      %v902 = vsub.f32 %v838, %v881
      %v903 = vsub.f32 %v841, %v883
      %v904 = vsub.f32 %v846, %v885
      %v905 = vsub.f32 %v849, %v887
      %v906 = vsub.f32 %v854, %v889
      %v907 = vsub.f32 %v857, %v891
      %v908 = vmul.f32 %v892, 1.442695
      %v909 = vpow.pop %v908
      %v910 = vmul.f32 %v893, 1.442695
      %v911 = vpow.pop %v910
      %v912 = vmul.f32 %v894, 1.442695
      %v913 = vpow.pop %v912
      %v914 = vmul.f32 %v895, 1.442695
      %v915 = vpow.pop %v914
      %v916 = vmul.f32 %v896, 1.442695
      %v917 = vpow.pop %v916
      %v918 = vmul.f32 %v897, 1.442695
      %v919 = vpow.pop %v918
      %v920 = vmul.f32 %v898, 1.442695
      %v921 = vpow.pop %v920
      %v922 = vmul.f32 %v899, 1.442695
      %v923 = vpow.pop %v922
      %v924 = vmul.f32 %v900, 1.442695
      %v925 = vpow.pop %v924
      %v926 = vmul.f32 %v901, 1.442695
      %v927 = vpow.pop %v926
      %v928 = vmul.f32 %v902, 1.442695
      %v929 = vpow.pop %v928
      %v930 = vmul.f32 %v903, 1.442695
      %v931 = vpow.pop %v930
      %v932 = vmul.f32 %v904, 1.442695
      %v933 = vpow.pop %v932
      %v934 = vmul.f32 %v905, 1.442695
      %v935 = vpow.pop %v934
      %v936 = vmul.f32 %v906, 1.442695
      %v937 = vpow.pop %v936
      %v938 = vmul.f32 %v907, 1.442695
      %v939 = vpow.pop %v938
      %940 = vadd.xlane.f32.xlu0 %v909
      %v941 = vpop.xlane.xlu0 %940
      %942 = vadd.xlane.f32.xlu0 %v911
      %v943 = vpop.xlane.xlu0 %942
      %944 = vadd.xlane.f32.xlu0 %v913
      %v945 = vpop.xlane.xlu0 %944
      %946 = vadd.xlane.f32.xlu0 %v915
      %v947 = vpop.xlane.xlu0 %946
      %948 = vadd.xlane.f32.xlu0 %v917
      %v949 = vpop.xlane.xlu0 %948
      %950 = vadd.xlane.f32.xlu0 %v919
      %v951 = vpop.xlane.xlu0 %950
      %952 = vadd.xlane.f32.xlu0 %v921
      %v953 = vpop.xlane.xlu0 %952
      %954 = vadd.xlane.f32.xlu0 %v923
      %v955 = vpop.xlane.xlu0 %954
      %956 = vadd.xlane.f32.xlu0 %v925
      %v957 = vpop.xlane.xlu0 %956
      %958 = vadd.xlane.f32.xlu0 %v927
      %v959 = vpop.xlane.xlu0 %958
      %960 = vadd.xlane.f32.xlu0 %v929
      %v961 = vpop.xlane.xlu0 %960
      %962 = vadd.xlane.f32.xlu0 %v931
      %v963 = vpop.xlane.xlu0 %962
      %964 = vadd.xlane.f32.xlu0 %v933
      %v965 = vpop.xlane.xlu0 %964
      %966 = vadd.xlane.f32.xlu0 %v935
      %v967 = vpop.xlane.xlu0 %966
      %968 = vadd.xlane.f32.xlu0 %v937
      %v969 = vpop.xlane.xlu0 %968
      %970 = vadd.xlane.f32.xlu0 %v939
      %v971 = vpop.xlane.xlu0 %970
      %v972 = vlog2.pop %v941
      %v973 = vmul.f32 %v972, 0.6931472
      %v974 = vlog2.pop %v943
      %v975 = vmul.f32 %v974, 0.6931472
      %v976 = vlog2.pop %v945
      %v977 = vmul.f32 %v976, 0.6931472
      %v978 = vlog2.pop %v947
      %v979 = vmul.f32 %v978, 0.6931472
      %v980 = vlog2.pop %v949
      %v981 = vmul.f32 %v980, 0.6931472
      %v982 = vlog2.pop %v951
      %v983 = vmul.f32 %v982, 0.6931472
      %v984 = vlog2.pop %v953
      %v985 = vmul.f32 %v984, 0.6931472
      %v986 = vlog2.pop %v955
      %v987 = vmul.f32 %v986, 0.6931472
      %v988 = vlog2.pop %v957
      %v989 = vmul.f32 %v988, 0.6931472
      %v990 = vlog2.pop %v959
      %v991 = vmul.f32 %v990, 0.6931472
      %v992 = vlog2.pop %v961
      %v993 = vmul.f32 %v992, 0.6931472
      %v994 = vlog2.pop %v963
      %v995 = vmul.f32 %v994, 0.6931472
      %v996 = vlog2.pop %v965
      %v997 = vmul.f32 %v996, 0.6931472
      %v998 = vlog2.pop %v967
      %v999 = vmul.f32 %v998, 0.6931472
      %v1000 = vlog2.pop %v969
      %v1001 = vmul.f32 %v1000, 0.6931472
      %v1002 = vlog2.pop %v971
      %v1003 = vmul.f32 %v1002, 0.6931472
      %v1004 = vsub.f32 %v892, %v973
      %v1005 = vsub.f32 %v893, %v975
      %v1006 = vsub.f32 %v894, %v977
      %v1007 = vsub.f32 %v895, %v979
      %v1008 = vsub.f32 %v896, %v981
      %v1009 = vsub.f32 %v897, %v983
      %v1010 = vsub.f32 %v898, %v985
      %v1011 = vsub.f32 %v899, %v987
      %v1012 = vsub.f32 %v900, %v989
      %v1013 = vsub.f32 %v901, %v991
      %v1014 = vsub.f32 %v902, %v993
      %v1015 = vsub.f32 %v903, %v995
      %v1016 = vsub.f32 %v904, %v997
      %v1017 = vsub.f32 %v905, %v999
      %v1018 = vsub.f32 %v906, %v1001
      %v1019 = vsub.f32 %v907, %v1003
      %1020 = vst [vmem:[%s280] sm:$0xff] %v1004
      %1021 = vst [vmem:[%s280 + $0x8] sm:$0xff] %v1005
      %1022 = vst [vmem:[%s280 + $0x10] sm:$0xff] %v1006
      %1023 = vst [vmem:[%s280 + $0x18] sm:$0xff] %v1007
      %1024 = vst [vmem:[%s280 + $0x20] sm:$0xff] %v1008
      %1025 = vst [vmem:[%s280 + $0x28] sm:$0xff] %v1009
      %1026 = vst [vmem:[%s280 + $0x30] sm:$0xff] %v1010
      %1027 = vst [vmem:[%s280 + $0x38] sm:$0xff] %v1011
      %1028 = vst [vmem:[%s280 + $0x40] sm:$0xff] %v1012
      %1029 = vst [vmem:[%s280 + $0x48] sm:$0xff] %v1013
      %1030 = vst [vmem:[%s280 + $0x50] sm:$0xff] %v1014
      %1031 = vst [vmem:[%s280 + $0x58] sm:$0xff] %v1015
      %1032 = vst [vmem:[%s280 + $0x60] sm:$0xff] %v1016
      %1033 = vst [vmem:[%s280 + $0x68] sm:$0xff] %v1017
      %1034 = vst [vmem:[%s280 + $0x70] sm:$0xff] %v1018
      %1035 = vst [vmem:[%s280 + $0x78] sm:$0xff] %v1019
      %s1036 = smul.u32 16, %s18
      %p1037 = scmp.lt.s32.totalorder %s1036, 31
      %s1038 = scalar_select %p1037, %s1036, 31
      %s1039 = smul.addr %s1038, 8
      %s1040 = scalar_lea.vmem %s7, %s1039
      // Predicated region
      $region49: #{mlp_forward.1} parent=47 // pred_check
        %p1041 = pneg %p188
      $region50: #{mlp_forward.1} parent=47 // pred_check_branch
        %1043 = sbr.rel (%p1041) target = $region52
      $region51: #{mlp_forward.1} parent=47 // pred_region
        %s1044 = smul.u32 16, %s18
      $region52: #{mlp_forward.1} parent=47 // pred_fallthru
        _
    $region48: #{mlp_forward.1} parent=5 // pred_fallthru
      _
    %p1045 = scmp.le.s32.totalorder 2, %s13
    // Predicated region
    $region53: #{mlp_forward.1} parent=5 // pred_check
      %p1046 = pneg %p1045
    $region54: #{mlp_forward.1} parent=5 // pred_check_branch
      %1048 = sbr.rel (%p1046) target = $region56
    $region55: #{mlp_forward.1} parent=5 // pred_region
      %s1049 = ssub.s32 %s13, 2
      // Predicated region
      $region57: #{mlp_forward.1} parent=55 // pred_check
        %p1050 = pneg %p194
      $region58: #{mlp_forward.1} parent=55 // pred_check_branch
        %1052 = sbr.rel (%p1050) target = $region60
      $region59: #{mlp_forward.1} parent=55 // pred_region
        %s1053 = smul.u32 16, %s19
        %p1054 = scmp.lt.s32.totalorder %s1053, 31
        %s1055 = scalar_select %p1054, %s1053, 31
        %s1056 = smul.addr %s1055, 8
        %s1057 = scalar_lea.vmem %s7, %s1056
      $region60: #{mlp_forward.1} parent=55 // pred_fallthru
        _
    $region56: #{mlp_forward.1} parent=5 // pred_fallthru
      _
  $region6: #{mlp_forward.1} parent=0 // loop_footer
    %s17 = sadd.s32 1, %s13
  $region7: #{mlp_forward.1} parent=0 // loop_footer_branch
    %12 = sbr.rel target = $region3
  $region8: #{mlp_forward.1} parent=0 // loop_exit
    _

</llo_original>
